<compile_context>
chip_gen: v7x
topology: tpu7x:2x2x1
jax: 0.10.0
libtpu: 0.0.40
codegen_flags: <defaults>
</compile_context>

<pallas_src>
import functools

import jax
import jax.numpy as jnp
from jax import lax
from jax.experimental import pallas as pl
from jax.experimental.pallas import tpu as pltpu


def block_kernel(x_ref, pos_ref, wqkv_ref, bqkv_ref, convw_ref, convb_ref,
                 cos_ref, sina_ref, sinb_ref, wout_ref, bout_ref,
                 lng_ref, lnb_ref, w1_ref, w2_ref, o_ref, attn_ref,
                 *, n_head, head_dim, seq_len):
    R = x_ref.shape[0]               # rows = bb * T  (batch folded into rows)
    C = x_ref.shape[1]
    T = seq_len
    bb = R // T
    D = head_dim
    half = D // 2
    C3 = 3 * C
    f32 = jnp.float32
    bf16 = jnp.bfloat16

    x = x_ref[...]                                   # (R, C) bf16

    # ---------------- attention branch ----------------
    # QKV projection: bf16 operands straight to the MXU, f32 accumulation.
    h = x + pos_ref[...]
    qkv = jnp.dot(h, wqkv_ref[...], preferred_element_type=f32)
    qkv = qkv + bqkv_ref[...].astype(f32)            # (R, 3C) f32

    # causal depthwise conv1d, kernel_size=3 (taps at t-2, t-1, t).
    # Rows fold batches; the roll crosses batch boundaries but the t-mod mask
    # zeroes any cross-batch contamination.
    tmod = lax.broadcasted_iota(jnp.int32, (R, 1), 0) % T
    qkv_m1 = jnp.where(tmod >= 1, pltpu.roll(qkv, 1, axis=0), 0.0)
    qkv_m2 = jnp.where(tmod >= 2, pltpu.roll(qkv, 2, axis=0), 0.0)
    cw = convw_ref[...].astype(f32)                  # (3, 3C): tap-major
    qkv = qkv_m2 * cw[0:1, :] + qkv_m1 * cw[1:2, :] + qkv * cw[2:3, :]
    qkv = qkv + convb_ref[...].astype(f32)

    q_all = qkv[:, 0:C]
    k_all = qkv[:, C:2 * C]
    v_all = qkv[:, 2 * C:C3]

    # Rotary (non-interleaved), all heads & all rows at once:
    #   rope(t) = t*cos + roll(t, C-half)*sinA + roll(t, half)*sinB
    # with sinA/sinB pre-masked per half so no select/concat is needed.
    cosf = cos_ref[...]
    sina = sina_ref[...]
    sinb = sinb_ref[...]

    def rope(t):
        return (t * cosf
                + pltpu.roll(t, C - half, axis=1) * sina
                + pltpu.roll(t, half, axis=1) * sinb)

    scale = 1.0 / (D ** 0.5)
    q_bf = (rope(q_all) * scale).astype(bf16)        # fold 1/sqrt(d) into q
    k_bf = rope(k_all).astype(bf16)
    v_bf = v_all.astype(bf16)

    # Attention: batch folded into a batched contraction per head; head
    # outputs written straight into a bf16 VMEM scratch slab (no concatenates).
    qi = lax.broadcasted_iota(jnp.int32, (T, T), 0)
    kj = lax.broadcasted_iota(jnp.int32, (T, T), 1)
    causal = (kj <= qi)[None, :, :]                  # (1, T, T) bool

    # TODO(synk): for long sequences (v7x 64 MiB VMEM) replace this dense
    # (T,T) softmax with a KV-tiled online-softmax grid axis.
    for hd in range(n_head):
        lo = hd * D
        qh = q_bf[:, lo:lo + D].reshape(bb, T, D)
        kh = k_bf[:, lo:lo + D].reshape(bb, T, D)
        vh = v_bf[:, lo:lo + D].reshape(bb, T, D)
        s = jnp.einsum('bqd,bkd->bqk', qh, kh, preferred_element_type=f32)
        s = jnp.where(causal, s, -1e30)
        s = s - jnp.max(s, axis=-1, keepdims=True)
        p = jnp.exp(s)
        p = p * pl.reciprocal(jnp.sum(p, axis=-1, keepdims=True), approx=True)
        o = jnp.einsum('bqk,bkd->bqd', p.astype(bf16), vh,
                       preferred_element_type=f32)
        attn_ref[:, lo:lo + D] = o.reshape(R, D).astype(bf16)

    sa = jnp.dot(attn_ref[...], wout_ref[...], preferred_element_type=f32)
    sa = sa + bout_ref[...].astype(f32)

    x1 = x.astype(f32) + sa                          # residual 1 (f32)

    # ---------------- LayerNorm + GeluFeedForward branch ----------------
    mu = jnp.mean(x1, axis=-1, keepdims=True)
    var = jnp.mean((x1 - mu) * (x1 - mu), axis=-1, keepdims=True)
    xn = (x1 - mu) * lax.rsqrt(var + 1e-5)
    xn = xn * lng_ref[...].astype(f32) + lnb_ref[...].astype(f32)

    h1 = jnp.dot(xn.astype(bf16), w1_ref[...], preferred_element_type=f32)
    # TODO(synk): PyTorch nn.GELU default is the exact erf form; using tanh
    # approx here for guaranteed Mosaic lowering (~1e-3 relative difference).
    h1 = jax.nn.gelu(h1, approximate=True)
    ff = jnp.dot(h1.astype(bf16), w2_ref[...], preferred_element_type=f32)

    o_ref[...] = (x1 + ff).astype(o_ref.dtype)


def block_forward(x, pos_emb, pos_dist_emb, params, *, n_head, head_dim, hidden):
    """x: (B,T,C) bf16; pos_emb: (T,C); pos_dist_emb is unused by the forward."""
    del pos_dist_emb  # unused in the PyTorch forward as well
    B, T, C = x.shape
    D = head_dim
    half = D // 2

    # Fold as many batch elements per grid step as keeps the row slab modest.
    max_rows = 1024
    bb = 1
    for d in range(1, B + 1):
        if B % d == 0 and d * T <= max_rows:
            bb = d
    nb = B // bb
    R = bb * T

    # Rotary tables (flash_attn RotaryEmbedding, base=10000, non-interleaved),
    # pre-expanded to full (R, C) width: cos duplicated per half, sin split into
    # a signed first-half table and a second-half table so the kernel needs only
    # two lane-rolls and three multiplies (no concats, no selects).
    inv_freq = 1.0 / (10000.0 ** (jnp.arange(0, D, 2, dtype=jnp.float32) / D))
    ang = jnp.arange(T, dtype=jnp.float32)[:, None] * inv_freq[None, :]   # (T, half)
    cos_h, sin_h = jnp.cos(ang), jnp.sin(ang)
    zeros = jnp.zeros_like(sin_h)
    cos_full = jnp.tile(jnp.concatenate([cos_h, cos_h], axis=-1), (bb, n_head))
    sin_a = jnp.tile(jnp.concatenate([-sin_h, zeros], axis=-1), (bb, n_head))
    sin_b = jnp.tile(jnp.concatenate([zeros, sin_h], axis=-1), (bb, n_head))

    pos_full = jnp.tile(pos_emb, (bb, 1))            # (R, C), bf16

    # Pre-transpose weights once (host/XLA side): kernel does dot(a, w), no .T.
    wqkv_t = params["wqkv"].T                        # (C, 3C)
    wout_t = params["wout"].T                        # (C, C)
    w1_t = params["w1"].T                            # (C, hidden)
    w2_t = params["w2"].T                            # (hidden, C)

    x2 = x.reshape(B * T, C)

    kernel = functools.partial(block_kernel, n_head=n_head, head_dim=D, seq_len=T)

    def full_spec(shape):
        return pl.BlockSpec(shape, lambda i: tuple(0 for _ in shape))

    # Explicit VMEM budget from the actual resident set (bf16 weights + tables +
    # double-buffered activation slabs + scratch + f32 temporaries), with headroom.
    resident = 2 * (3 * C * C + C * C + 2 * C * hidden)   # bf16 weights
    resident += 2 * R * C + 3 * 4 * R * C                 # pos + rope tables
    resident += 2 * 2 * 2 * R * C                         # x/out blocks (dbl-buffered)
    resident += 2 * R * C                                 # attn scratch (bf16)
    resident += 6 * 4 * R * 3 * C                         # f32 qkv temporaries
    vmem_bytes = int(min(max(2 * resident, 16 * 1024 * 1024), 64 * 1024 * 1024))

    out = pl.pallas_call(
        kernel,
        out_shape=jax.ShapeDtypeStruct((B * T, C), x.dtype),
        grid=(nb,),
        in_specs=[
            pl.BlockSpec((R, C), lambda i: (i, 0)),   # x rows (batch folded)
            full_spec((R, C)),                        # pos_emb (batch-tiled)
            full_spec((C, 3 * C)),                    # Wqkv^T
            full_spec((1, 3 * C)),                    # b_qkv
            full_spec((3, 3 * C)),                    # dwconv weight (tap-major: t-2,t-1,t)
            full_spec((1, 3 * C)),                    # dwconv bias
            full_spec((R, C)),                        # rope cos
            full_spec((R, C)),                        # rope sin (first half, signed)
            full_spec((R, C)),                        # rope sin (second half)
            full_spec((C, C)),                        # Wout^T
            full_spec((1, C)),                        # b_out
            full_spec((1, C)),                        # ln gamma
            full_spec((1, C)),                        # ln beta
            full_spec((C, hidden)),                   # FFN W1^T (bias=False)
            full_spec((hidden, C)),                   # FFN W2^T (bias=False)
        ],
        out_specs=pl.BlockSpec((R, C), lambda i: (i, 0)),
        scratch_shapes=[pltpu.VMEM((R, C), jnp.bfloat16)],
        compiler_params=pltpu.CompilerParams(
            dimension_semantics=("parallel",),
            vmem_limit_bytes=vmem_bytes,
        ),
    )(x2, pos_full, wqkv_t, params["bqkv"], params["convw"], params["convb"],
      cos_full, sin_a, sin_b, wout_t, params["bout"], params["lng"], params["lnb"],
      w1_t, w2_t)

    return out.reshape(B, T, C)


if __name__ == "__main__":
    # small config consistent with the module: n_embed=32, n_head=4,
    # head_size=8, hidden_size=64, seq=8, batch=2, precision=bfloat16
    B, T, C = 2, 8, 32
    n_head, head_dim, hidden = 4, 8, 64
    dt = jnp.bfloat16

    key = jax.random.PRNGKey(0)
    ks = jax.random.split(key, 12)

    x = jax.random.normal(ks[0], (B, T, C), dtype=jnp.float32).astype(dt)
    pos_emb = (0.02 * jax.random.normal(ks[1], (T, C), dtype=jnp.float32)).astype(dt)
    pos_dist_emb = (0.02 * jax.random.normal(ks[2], (T, C), dtype=jnp.float32)).astype(dt)

    params = dict(
        wqkv=(0.02 * jax.random.normal(ks[3], (3 * C, C), dtype=jnp.float32)).astype(dt),
        bqkv=(0.01 * jax.random.normal(ks[4], (1, 3 * C), dtype=jnp.float32)).astype(dt),
        # (3, 3C), tap-major: row 0 multiplies x[t-2], row 2 multiplies x[t]
        # (repack of PyTorch Conv1d weight (3C, 1, 3) via transpose).
        convw=(0.3 * jax.random.normal(ks[5], (3, 3 * C), dtype=jnp.float32)).astype(dt),
        convb=(0.01 * jax.random.normal(ks[6], (1, 3 * C), dtype=jnp.float32)).astype(dt),
        wout=(0.02 * jax.random.normal(ks[7], (C, C), dtype=jnp.float32)).astype(dt),
        bout=(0.01 * jax.random.normal(ks[8], (1, C), dtype=jnp.float32)).astype(dt),
        lng=jnp.ones((1, C), dt),
        lnb=jnp.zeros((1, C), dt),
        w1=(0.02 * jax.random.normal(ks[9], (hidden, C), dtype=jnp.float32)).astype(dt),
        w2=(0.02 * jax.random.normal(ks[10], (C, hidden), dtype=jnp.float32)).astype(dt),
    )

    y = block_forward(x, pos_emb, pos_dist_emb, params,
                      n_head=n_head, head_dim=head_dim, hidden=hidden)
    y = jax.block_until_ready(y)
    assert y.shape == (B, T, C) and y.dtype == dt
    assert bool(jnp.all(jnp.isfinite(y.astype(jnp.float32))))
    print("KERNEL_OK")
</pallas_src>

<mosaic_0001>
module attributes {stable_mosaic.version = 11 : i64} {
  func.func @block_kernel(%arg0: i32, %arg1: memref<16x32xbf16, #tpu.memory_space<vmem>>, %arg2: memref<16x32xbf16, #tpu.memory_space<vmem>>, %arg3: memref<32x96xbf16, #tpu.memory_space<vmem>>, %arg4: memref<1x96xbf16, #tpu.memory_space<vmem>>, %arg5: memref<3x96xbf16, #tpu.memory_space<vmem>>, %arg6: memref<1x96xbf16, #tpu.memory_space<vmem>>, %arg7: memref<16x32xf32, #tpu.memory_space<vmem>>, %arg8: memref<16x32xf32, #tpu.memory_space<vmem>>, %arg9: memref<16x32xf32, #tpu.memory_space<vmem>>, %arg10: memref<32x32xbf16, #tpu.memory_space<vmem>>, %arg11: memref<1x32xbf16, #tpu.memory_space<vmem>>, %arg12: memref<1x32xbf16, #tpu.memory_space<vmem>>, %arg13: memref<1x32xbf16, #tpu.memory_space<vmem>>, %arg14: memref<32x64xbf16, #tpu.memory_space<vmem>>, %arg15: memref<64x32xbf16, #tpu.memory_space<vmem>>, %arg16: memref<16x32xbf16, #tpu.memory_space<vmem>>, %arg17: memref<16x32xbf16, #tpu.memory_space<vmem>>) attributes {dimension_semantics = [#tpu.dimension_semantics<parallel>], iteration_bounds = array<i64: 1>, scalar_prefetch = 0 : i64, scratch_operands = 1 : i64, tpu.core_type = #tpu.core_type<tc>, window_params = [{transform_indices = @transform_0, window_bounds = array<i64: 16, 32>}, {pipeline_mode = #tpu.pipeline_mode<synchronous>, transform_indices = @transform_1, window_bounds = array<i64: 16, 32>}, {pipeline_mode = #tpu.pipeline_mode<synchronous>, transform_indices = @transform_2, window_bounds = array<i64: 32, 96>}, {pipeline_mode = #tpu.pipeline_mode<synchronous>, transform_indices = @transform_3, window_bounds = array<i64: 1, 96>}, {pipeline_mode = #tpu.pipeline_mode<synchronous>, transform_indices = @transform_4, window_bounds = array<i64: 3, 96>}, {pipeline_mode = #tpu.pipeline_mode<synchronous>, transform_indices = @transform_5, window_bounds = array<i64: 1, 96>}, {pipeline_mode = #tpu.pipeline_mode<synchronous>, transform_indices = @transform_6, window_bounds = array<i64: 16, 32>}, {pipeline_mode = #tpu.pipeline_mode<synchronous>, transform_indices = @transform_7, window_bounds = array<i64: 16, 32>}, {pipeline_mode = #tpu.pipeline_mode<synchronous>, transform_indices = @transform_8, window_bounds = array<i64: 16, 32>}, {pipeline_mode = #tpu.pipeline_mode<synchronous>, transform_indices = @transform_9, window_bounds = array<i64: 32, 32>}, {pipeline_mode = #tpu.pipeline_mode<synchronous>, transform_indices = @transform_10, window_bounds = array<i64: 1, 32>}, {pipeline_mode = #tpu.pipeline_mode<synchronous>, transform_indices = @transform_11, window_bounds = array<i64: 1, 32>}, {pipeline_mode = #tpu.pipeline_mode<synchronous>, transform_indices = @transform_12, window_bounds = array<i64: 1, 32>}, {pipeline_mode = #tpu.pipeline_mode<synchronous>, transform_indices = @transform_13, window_bounds = array<i64: 32, 64>}, {pipeline_mode = #tpu.pipeline_mode<synchronous>, transform_indices = @transform_14, window_bounds = array<i64: 64, 32>}, {transform_indices = @transform_15, window_bounds = array<i64: 16, 32>}]} {
    %c0 = arith.constant 0 : index
    %c0_0 = arith.constant 0 : index
    %0 = vector.load %arg1[%c0, %c0_0] : memref<16x32xbf16, #tpu.memory_space<vmem>>, vector<16x32xbf16>
    %c0_1 = arith.constant 0 : index
    %c0_2 = arith.constant 0 : index
    %1 = vector.load %arg2[%c0_1, %c0_2] : memref<16x32xbf16, #tpu.memory_space<vmem>>, vector<16x32xbf16>
    %2 = arith.addf %0, %1 : vector<16x32xbf16>
    %c0_3 = arith.constant 0 : index
    %c0_4 = arith.constant 0 : index
    %3 = vector.load %arg3[%c0_3, %c0_4] : memref<32x96xbf16, #tpu.memory_space<vmem>>, vector<32x96xbf16>
    %cst = arith.constant dense<0.000000e+00> : vector<16x96xf32>
    %4 = tpu.matmul %2, %3, %cst {dimension_numbers = #tpu.dot_dimension_numbers<[1], [0], [0], [1], [0, 0, 1, 1], [], []>} : vector<16x32xbf16>, vector<32x96xbf16>, vector<16x96xf32> -> vector<16x96xf32>
    %c0_5 = arith.constant 0 : index
    %c0_6 = arith.constant 0 : index
    %5 = vector.load %arg4[%c0_5, %c0_6] : memref<1x96xbf16, #tpu.memory_space<vmem>>, vector<1x96xbf16>
    %6 = arith.extf %5 : vector<1x96xbf16> to vector<1x96xf32>
    %7 = vector.broadcast %6 : vector<1x96xf32> to vector<16x96xf32>
    %8 = arith.addf %4, %7 : vector<16x96xf32>
    %9 = tpu.iota {dimensions = array<i32: 0>} : vector<16x1xi32>
    %c8_i32 = arith.constant 8 : i32
    %c0_i32 = arith.constant 0 : i32
    %10 = arith.cmpi eq, %c8_i32, %c0_i32 : i32
    %c1_i32 = arith.constant 1 : i32
    %11 = arith.select %10, %c1_i32, %c8_i32 : i32
    %12 = vector.broadcast %11 : i32 to vector<16x1xi32>
    %13 = arith.remsi %9, %12 : vector<16x1xi32>
    %c0_i32_7 = arith.constant 0 : i32
    %14 = vector.broadcast %c0_i32_7 : i32 to vector<16x1xi32>
    %15 = arith.cmpi ne, %13, %14 : vector<16x1xi32>
    %c0_i32_8 = arith.constant 0 : i32
    %16 = vector.broadcast %c0_i32_8 : i32 to vector<16x1xi32>
    %17 = arith.cmpi slt, %13, %16 : vector<16x1xi32>
    %c0_i32_9 = arith.constant 0 : i32
    %18 = arith.cmpi slt, %11, %c0_i32_9 : i32
    %19 = vector.broadcast %18 : i1 to vector<16x1xi1>
    %20 = vector.broadcast %19 : vector<16x1xi1> to vector<16x1xi1>
    %21 = arith.xori %17, %20 : vector<16x1xi1>
    %22 = arith.andi %21, %15 : vector<16x1xi1>
    %23 = vector.broadcast %11 : i32 to vector<16x1xi32>
    %24 = arith.addi %13, %23 : vector<16x1xi32>
    %25 = arith.select %22, %24, %13 : vector<16x1xi1>, vector<16x1xi32>
    %c1_i32_10 = arith.constant 1 : i32
    %26 = vector.broadcast %c1_i32_10 : i32 to vector<16x1xi32>
    %27 = arith.cmpi sge, %25, %26 : vector<16x1xi32>
    %c1_i32_11 = arith.constant 1 : i32
    %28 = tpu.dynamic_rotate %8 by %c1_i32_11 dim 0 : vector<16x96xf32>, i32 -> vector<16x96xf32>
    %cst_12 = arith.constant 0.000000e+00 : f32
    %29 = vector.shape_cast %27 : vector<16x1xi1> to vector<16x1xi1>
    %30 = vector.broadcast %29 : vector<16x1xi1> to vector<16x96xi1>
    %31 = vector.broadcast %cst_12 : f32 to vector<16x96xf32>
    %32 = arith.select %30, %28, %31 : vector<16x96xi1>, vector<16x96xf32>
    %c2_i32 = arith.constant 2 : i32
    %33 = vector.broadcast %c2_i32 : i32 to vector<16x1xi32>
    %34 = arith.cmpi sge, %25, %33 : vector<16x1xi32>
    %c2_i32_13 = arith.constant 2 : i32
    %35 = tpu.dynamic_rotate %8 by %c2_i32_13 dim 0 : vector<16x96xf32>, i32 -> vector<16x96xf32>
    %cst_14 = arith.constant 0.000000e+00 : f32
    %36 = vector.shape_cast %34 : vector<16x1xi1> to vector<16x1xi1>
    %37 = vector.broadcast %36 : vector<16x1xi1> to vector<16x96xi1>
    %38 = vector.broadcast %cst_14 : f32 to vector<16x96xf32>
    %39 = arith.select %37, %35, %38 : vector<16x96xi1>, vector<16x96xf32>
    %c0_15 = arith.constant 0 : index
    %c0_16 = arith.constant 0 : index
    %40 = vector.load %arg5[%c0_15, %c0_16] : memref<3x96xbf16, #tpu.memory_space<vmem>>, vector<3x96xbf16>
    %41 = arith.extf %40 : vector<3x96xbf16> to vector<3x96xf32>
    %42 = vector.extract_strided_slice %41 {offsets = [0, 0], sizes = [1, 96], strides = [1, 1]} : vector<3x96xf32> to vector<1x96xf32>
    %43 = vector.broadcast %42 : vector<1x96xf32> to vector<16x96xf32>
    %44 = arith.mulf %39, %43 : vector<16x96xf32>
    %45 = vector.extract_strided_slice %41 {offsets = [1, 0], sizes = [1, 96], strides = [1, 1]} : vector<3x96xf32> to vector<1x96xf32>
    %46 = vector.broadcast %45 : vector<1x96xf32> to vector<16x96xf32>
    %47 = arith.mulf %32, %46 : vector<16x96xf32>
    %48 = arith.addf %44, %47 : vector<16x96xf32>
    %49 = vector.extract_strided_slice %41 {offsets = [2, 0], sizes = [1, 96], strides = [1, 1]} : vector<3x96xf32> to vector<1x96xf32>
    %50 = vector.broadcast %49 : vector<1x96xf32> to vector<16x96xf32>
    %51 = arith.mulf %8, %50 : vector<16x96xf32>
    %52 = arith.addf %48, %51 : vector<16x96xf32>
    %c0_17 = arith.constant 0 : index
    %c0_18 = arith.constant 0 : index
    %53 = vector.load %arg6[%c0_17, %c0_18] : memref<1x96xbf16, #tpu.memory_space<vmem>>, vector<1x96xbf16>
    %54 = arith.extf %53 : vector<1x96xbf16> to vector<1x96xf32>
    %55 = vector.broadcast %54 : vector<1x96xf32> to vector<16x96xf32>
    %56 = arith.addf %52, %55 : vector<16x96xf32>
    %57 = vector.extract_strided_slice %56 {offsets = [0, 0], sizes = [16, 32], strides = [1, 1]} : vector<16x96xf32> to vector<16x32xf32>
    %58 = vector.extract_strided_slice %56 {offsets = [0, 32], sizes = [16, 32], strides = [1, 1]} : vector<16x96xf32> to vector<16x32xf32>
    %59 = vector.extract_strided_slice %56 {offsets = [0, 64], sizes = [16, 32], strides = [1, 1]} : vector<16x96xf32> to vector<16x32xf32>
    %c0_19 = arith.constant 0 : index
    %c0_20 = arith.constant 0 : index
    %60 = vector.load %arg7[%c0_19, %c0_20] : memref<16x32xf32, #tpu.memory_space<vmem>>, vector<16x32xf32>
    %c0_21 = arith.constant 0 : index
    %c0_22 = arith.constant 0 : index
    %61 = vector.load %arg8[%c0_21, %c0_22] : memref<16x32xf32, #tpu.memory_space<vmem>>, vector<16x32xf32>
    %c0_23 = arith.constant 0 : index
    %c0_24 = arith.constant 0 : index
    %62 = vector.load %arg9[%c0_23, %c0_24] : memref<16x32xf32, #tpu.memory_space<vmem>>, vector<16x32xf32>
    %63 = arith.mulf %57, %60 : vector<16x32xf32>
    %c28_i32 = arith.constant 28 : i32
    %64 = tpu.dynamic_rotate %57 by %c28_i32 dim 1 : vector<16x32xf32>, i32 -> vector<16x32xf32>
    %65 = arith.mulf %64, %61 : vector<16x32xf32>
    %66 = arith.addf %63, %65 : vector<16x32xf32>
    %c4_i32 = arith.constant 4 : i32
    %67 = tpu.dynamic_rotate %57 by %c4_i32 dim 1 : vector<16x32xf32>, i32 -> vector<16x32xf32>
    %68 = arith.mulf %67, %62 : vector<16x32xf32>
    %69 = arith.addf %66, %68 : vector<16x32xf32>
    %cst_25 = arith.constant 0.353553385 : f32
    %70 = vector.broadcast %cst_25 : f32 to vector<16x32xf32>
    %71 = arith.mulf %69, %70 : vector<16x32xf32>
    %72 = arith.truncf %71 : vector<16x32xf32> to vector<16x32xbf16>
    %73 = arith.mulf %58, %60 : vector<16x32xf32>
    %c28_i32_26 = arith.constant 28 : i32
    %74 = tpu.dynamic_rotate %58 by %c28_i32_26 dim 1 : vector<16x32xf32>, i32 -> vector<16x32xf32>
    %75 = arith.mulf %74, %61 : vector<16x32xf32>
    %76 = arith.addf %73, %75 : vector<16x32xf32>
    %c4_i32_27 = arith.constant 4 : i32
    %77 = tpu.dynamic_rotate %58 by %c4_i32_27 dim 1 : vector<16x32xf32>, i32 -> vector<16x32xf32>
    %78 = arith.mulf %77, %62 : vector<16x32xf32>
    %79 = arith.addf %76, %78 : vector<16x32xf32>
    %80 = arith.truncf %79 : vector<16x32xf32> to vector<16x32xbf16>
    %81 = arith.truncf %59 : vector<16x32xf32> to vector<16x32xbf16>
    %82 = tpu.iota {dimensions = array<i32: 0>} : vector<8x8xi32>
    %83 = tpu.iota {dimensions = array<i32: 1>} : vector<8x8xi32>
    %84 = arith.cmpi sle, %83, %82 : vector<8x8xi32>
    %85 = vector.shape_cast %84 : vector<8x8xi1> to vector<1x8x8xi1>
    %86 = vector.extract_strided_slice %72 {offsets = [0, 0], sizes = [16, 8], strides = [1, 1]} : vector<16x32xbf16> to vector<16x8xbf16>
    %87 = vector.shape_cast %86 : vector<16x8xbf16> to vector<2x8x8xbf16>
    %88 = vector.extract_strided_slice %80 {offsets = [0, 0], sizes = [16, 8], strides = [1, 1]} : vector<16x32xbf16> to vector<16x8xbf16>
    %89 = vector.shape_cast %88 : vector<16x8xbf16> to vector<2x8x8xbf16>
    %90 = vector.extract_strided_slice %81 {offsets = [0, 0], sizes = [16, 8], strides = [1, 1]} : vector<16x32xbf16> to vector<16x8xbf16>
    %91 = vector.shape_cast %90 : vector<16x8xbf16> to vector<2x8x8xbf16>
    "tpu.trace_start"() <{level = 10 : i32, message = "bqd,bkd->bqk"}> : () -> ()
    %cst_28 = arith.constant dense<0.000000e+00> : vector<2x8x8xf32>
    %92 = tpu.matmul %87, %89, %cst_28 {dimension_numbers = #tpu.dot_dimension_numbers<[2], [2], [1], [1], [0, 0, 0, 1, 1, 1], [0], [0]>} : vector<2x8x8xbf16>, vector<2x8x8xbf16>, vector<2x8x8xf32> -> vector<2x8x8xf32>
    %cst_29 = arith.constant -1.000000e+30 : f32
    "tpu.trace_stop"() : () -> ()
    %93 = vector.shape_cast %85 : vector<1x8x8xi1> to vector<1x8x8xi1>
    %94 = vector.broadcast %93 : vector<1x8x8xi1> to vector<2x8x8xi1>
    %95 = vector.broadcast %cst_29 : f32 to vector<2x8x8xf32>
    %96 = arith.select %94, %92, %95 : vector<2x8x8xi1>, vector<2x8x8xf32>
    %cst_30 = arith.constant dense<0xFF800000> : vector<2x8xf32>
    %97 = vector.multi_reduction <maximumf>, %96, %cst_30 [2] : vector<2x8x8xf32> to vector<2x8xf32>
    %98 = vector.shape_cast %97 : vector<2x8xf32> to vector<2x8x1xf32>
    %99 = vector.broadcast %98 : vector<2x8x1xf32> to vector<2x8x8xf32>
    %100 = arith.subf %96, %99 : vector<2x8x8xf32>
    %101 = math.exp %100 : vector<2x8x8xf32>
    %cst_31 = arith.constant dense<0.000000e+00> : vector<2x8xf32>
    %102 = vector.multi_reduction <add>, %101, %cst_31 [2] : vector<2x8x8xf32> to vector<2x8xf32>
    %103 = vector.shape_cast %102 : vector<2x8xf32> to vector<2x8x1xf32>
    %104 = tpu.reciprocal %103 {approx = true} : vector<2x8x1xf32> -> vector<2x8x1xf32>
    %105 = vector.broadcast %104 : vector<2x8x1xf32> to vector<2x8x8xf32>
    %106 = arith.mulf %101, %105 : vector<2x8x8xf32>
    %107 = arith.truncf %106 : vector<2x8x8xf32> to vector<2x8x8xbf16>
    "tpu.trace_start"() <{level = 10 : i32, message = "bqk,bkd->bqd"}> : () -> ()
    %cst_32 = arith.constant dense<0.000000e+00> : vector<2x8x8xf32>
    %108 = tpu.matmul %107, %91, %cst_32 {dimension_numbers = #tpu.dot_dimension_numbers<[2], [1], [1], [2], [0, 0, 0, 1, 1, 2], [0], [0]>} : vector<2x8x8xbf16>, vector<2x8x8xbf16>, vector<2x8x8xf32> -> vector<2x8x8xf32>
    "tpu.trace_stop"() : () -> ()
    %109 = vector.shape_cast %108 : vector<2x8x8xf32> to vector<16x8xf32>
    %110 = arith.truncf %109 : vector<16x8xf32> to vector<16x8xbf16>
    %c0_33 = arith.constant 0 : index
    %c0_34 = arith.constant 0 : index
    %111 = vector.load %arg17[%c0_33, %c0_34] : memref<16x32xbf16, #tpu.memory_space<vmem>>, vector<16x8xbf16>
    tpu.vector_store %arg17[%c0_33, %c0_34], %110 {strides = array<i32>} : memref<16x32xbf16, #tpu.memory_space<vmem>>, vector<16x8xbf16>,
    %112 = vector.extract_strided_slice %72 {offsets = [0, 8], sizes = [16, 8], strides = [1, 1]} : vector<16x32xbf16> to vector<16x8xbf16>
    %113 = vector.shape_cast %112 : vector<16x8xbf16> to vector<2x8x8xbf16>
    %114 = vector.extract_strided_slice %80 {offsets = [0, 8], sizes = [16, 8], strides = [1, 1]} : vector<16x32xbf16> to vector<16x8xbf16>
    %115 = vector.shape_cast %114 : vector<16x8xbf16> to vector<2x8x8xbf16>
    %116 = vector.extract_strided_slice %81 {offsets = [0, 8], sizes = [16, 8], strides = [1, 1]} : vector<16x32xbf16> to vector<16x8xbf16>
    %117 = vector.shape_cast %116 : vector<16x8xbf16> to vector<2x8x8xbf16>
    "tpu.trace_start"() <{level = 10 : i32, message = "bqd,bkd->bqk"}> : () -> ()
    %cst_35 = arith.constant dense<0.000000e+00> : vector<2x8x8xf32>
    %118 = tpu.matmul %113, %115, %cst_35 {dimension_numbers = #tpu.dot_dimension_numbers<[2], [2], [1], [1], [0, 0, 0, 1, 1, 1], [0], [0]>} : vector<2x8x8xbf16>, vector<2x8x8xbf16>, vector<2x8x8xf32> -> vector<2x8x8xf32>
    %cst_36 = arith.constant -1.000000e+30 : f32
    "tpu.trace_stop"() : () -> ()
    %119 = vector.shape_cast %85 : vector<1x8x8xi1> to vector<1x8x8xi1>
    %120 = vector.broadcast %119 : vector<1x8x8xi1> to vector<2x8x8xi1>
    %121 = vector.broadcast %cst_36 : f32 to vector<2x8x8xf32>
    %122 = arith.select %120, %118, %121 : vector<2x8x8xi1>, vector<2x8x8xf32>
    %cst_37 = arith.constant dense<0xFF800000> : vector<2x8xf32>
    %123 = vector.multi_reduction <maximumf>, %122, %cst_37 [2] : vector<2x8x8xf32> to vector<2x8xf32>
    %124 = vector.shape_cast %123 : vector<2x8xf32> to vector<2x8x1xf32>
    %125 = vector.broadcast %124 : vector<2x8x1xf32> to vector<2x8x8xf32>
    %126 = arith.subf %122, %125 : vector<2x8x8xf32>
    %127 = math.exp %126 : vector<2x8x8xf32>
    %cst_38 = arith.constant dense<0.000000e+00> : vector<2x8xf32>
    %128 = vector.multi_reduction <add>, %127, %cst_38 [2] : vector<2x8x8xf32> to vector<2x8xf32>
    %129 = vector.shape_cast %128 : vector<2x8xf32> to vector<2x8x1xf32>
    %130 = tpu.reciprocal %129 {approx = true} : vector<2x8x1xf32> -> vector<2x8x1xf32>
    %131 = vector.broadcast %130 : vector<2x8x1xf32> to vector<2x8x8xf32>
    %132 = arith.mulf %127, %131 : vector<2x8x8xf32>
    %133 = arith.truncf %132 : vector<2x8x8xf32> to vector<2x8x8xbf16>
    "tpu.trace_start"() <{level = 10 : i32, message = "bqk,bkd->bqd"}> : () -> ()
    %cst_39 = arith.constant dense<0.000000e+00> : vector<2x8x8xf32>
    %134 = tpu.matmul %133, %117, %cst_39 {dimension_numbers = #tpu.dot_dimension_numbers<[2], [1], [1], [2], [0, 0, 0, 1, 1, 2], [0], [0]>} : vector<2x8x8xbf16>, vector<2x8x8xbf16>, vector<2x8x8xf32> -> vector<2x8x8xf32>
    "tpu.trace_stop"() : () -> ()
    %135 = vector.shape_cast %134 : vector<2x8x8xf32> to vector<16x8xf32>
    %136 = arith.truncf %135 : vector<16x8xf32> to vector<16x8xbf16>
    %c0_40 = arith.constant 0 : index
    %c8 = arith.constant 8 : index
    %137 = vector.load %arg17[%c0_40, %c8] : memref<16x32xbf16, #tpu.memory_space<vmem>>, vector<16x8xbf16>
    tpu.vector_store %arg17[%c0_40, %c8], %136 {strides = array<i32>} : memref<16x32xbf16, #tpu.memory_space<vmem>>, vector<16x8xbf16>,
    %138 = vector.extract_strided_slice %72 {offsets = [0, 16], sizes = [16, 8], strides = [1, 1]} : vector<16x32xbf16> to vector<16x8xbf16>
    %139 = vector.shape_cast %138 : vector<16x8xbf16> to vector<2x8x8xbf16>
    %140 = vector.extract_strided_slice %80 {offsets = [0, 16], sizes = [16, 8], strides = [1, 1]} : vector<16x32xbf16> to vector<16x8xbf16>
    %141 = vector.shape_cast %140 : vector<16x8xbf16> to vector<2x8x8xbf16>
    %142 = vector.extract_strided_slice %81 {offsets = [0, 16], sizes = [16, 8], strides = [1, 1]} : vector<16x32xbf16> to vector<16x8xbf16>
    %143 = vector.shape_cast %142 : vector<16x8xbf16> to vector<2x8x8xbf16>
    "tpu.trace_start"() <{level = 10 : i32, message = "bqd,bkd->bqk"}> : () -> ()
    %cst_41 = arith.constant dense<0.000000e+00> : vector<2x8x8xf32>
    %144 = tpu.matmul %139, %141, %cst_41 {dimension_numbers = #tpu.dot_dimension_numbers<[2], [2], [1], [1], [0, 0, 0, 1, 1, 1], [0], [0]>} : vector<2x8x8xbf16>, vector<2x8x8xbf16>, vector<2x8x8xf32> -> vector<2x8x8xf32>
    %cst_42 = arith.constant -1.000000e+30 : f32
    "tpu.trace_stop"() : () -> ()
    %145 = vector.shape_cast %85 : vector<1x8x8xi1> to vector<1x8x8xi1>
    %146 = vector.broadcast %145 : vector<1x8x8xi1> to vector<2x8x8xi1>
    %147 = vector.broadcast %cst_42 : f32 to vector<2x8x8xf32>
    %148 = arith.select %146, %144, %147 : vector<2x8x8xi1>, vector<2x8x8xf32>
    %cst_43 = arith.constant dense<0xFF800000> : vector<2x8xf32>
    %149 = vector.multi_reduction <maximumf>, %148, %cst_43 [2] : vector<2x8x8xf32> to vector<2x8xf32>
    %150 = vector.shape_cast %149 : vector<2x8xf32> to vector<2x8x1xf32>
    %151 = vector.broadcast %150 : vector<2x8x1xf32> to vector<2x8x8xf32>
    %152 = arith.subf %148, %151 : vector<2x8x8xf32>
    %153 = math.exp %152 : vector<2x8x8xf32>
    %cst_44 = arith.constant dense<0.000000e+00> : vector<2x8xf32>
    %154 = vector.multi_reduction <add>, %153, %cst_44 [2] : vector<2x8x8xf32> to vector<2x8xf32>
    %155 = vector.shape_cast %154 : vector<2x8xf32> to vector<2x8x1xf32>
    %156 = tpu.reciprocal %155 {approx = true} : vector<2x8x1xf32> -> vector<2x8x1xf32>
    %157 = vector.broadcast %156 : vector<2x8x1xf32> to vector<2x8x8xf32>
    %158 = arith.mulf %153, %157 : vector<2x8x8xf32>
    %159 = arith.truncf %158 : vector<2x8x8xf32> to vector<2x8x8xbf16>
    "tpu.trace_start"() <{level = 10 : i32, message = "bqk,bkd->bqd"}> : () -> ()
    %cst_45 = arith.constant dense<0.000000e+00> : vector<2x8x8xf32>
    %160 = tpu.matmul %159, %143, %cst_45 {dimension_numbers = #tpu.dot_dimension_numbers<[2], [1], [1], [2], [0, 0, 0, 1, 1, 2], [0], [0]>} : vector<2x8x8xbf16>, vector<2x8x8xbf16>, vector<2x8x8xf32> -> vector<2x8x8xf32>
    "tpu.trace_stop"() : () -> ()
    %161 = vector.shape_cast %160 : vector<2x8x8xf32> to vector<16x8xf32>
    %162 = arith.truncf %161 : vector<16x8xf32> to vector<16x8xbf16>
    %c0_46 = arith.constant 0 : index
    %c16 = arith.constant 16 : index
    %163 = vector.load %arg17[%c0_46, %c16] : memref<16x32xbf16, #tpu.memory_space<vmem>>, vector<16x8xbf16>
    tpu.vector_store %arg17[%c0_46, %c16], %162 {strides = array<i32>} : memref<16x32xbf16, #tpu.memory_space<vmem>>, vector<16x8xbf16>,
    %164 = vector.extract_strided_slice %72 {offsets = [0, 24], sizes = [16, 8], strides = [1, 1]} : vector<16x32xbf16> to vector<16x8xbf16>
    %165 = vector.shape_cast %164 : vector<16x8xbf16> to vector<2x8x8xbf16>
    %166 = vector.extract_strided_slice %80 {offsets = [0, 24], sizes = [16, 8], strides = [1, 1]} : vector<16x32xbf16> to vector<16x8xbf16>
    %167 = vector.shape_cast %166 : vector<16x8xbf16> to vector<2x8x8xbf16>
    %168 = vector.extract_strided_slice %81 {offsets = [0, 24], sizes = [16, 8], strides = [1, 1]} : vector<16x32xbf16> to vector<16x8xbf16>
    %169 = vector.shape_cast %168 : vector<16x8xbf16> to vector<2x8x8xbf16>
    "tpu.trace_start"() <{level = 10 : i32, message = "bqd,bkd->bqk"}> : () -> ()
    %cst_47 = arith.constant dense<0.000000e+00> : vector<2x8x8xf32>
    %170 = tpu.matmul %165, %167, %cst_47 {dimension_numbers = #tpu.dot_dimension_numbers<[2], [2], [1], [1], [0, 0, 0, 1, 1, 1], [0], [0]>} : vector<2x8x8xbf16>, vector<2x8x8xbf16>, vector<2x8x8xf32> -> vector<2x8x8xf32>
    %cst_48 = arith.constant -1.000000e+30 : f32
    "tpu.trace_stop"() : () -> ()
    %171 = vector.shape_cast %85 : vector<1x8x8xi1> to vector<1x8x8xi1>
    %172 = vector.broadcast %171 : vector<1x8x8xi1> to vector<2x8x8xi1>
    %173 = vector.broadcast %cst_48 : f32 to vector<2x8x8xf32>
    %174 = arith.select %172, %170, %173 : vector<2x8x8xi1>, vector<2x8x8xf32>
    %cst_49 = arith.constant dense<0xFF800000> : vector<2x8xf32>
    %175 = vector.multi_reduction <maximumf>, %174, %cst_49 [2] : vector<2x8x8xf32> to vector<2x8xf32>
    %176 = vector.shape_cast %175 : vector<2x8xf32> to vector<2x8x1xf32>
    %177 = vector.broadcast %176 : vector<2x8x1xf32> to vector<2x8x8xf32>
    %178 = arith.subf %174, %177 : vector<2x8x8xf32>
    %179 = math.exp %178 : vector<2x8x8xf32>
    %cst_50 = arith.constant dense<0.000000e+00> : vector<2x8xf32>
    %180 = vector.multi_reduction <add>, %179, %cst_50 [2] : vector<2x8x8xf32> to vector<2x8xf32>
    %181 = vector.shape_cast %180 : vector<2x8xf32> to vector<2x8x1xf32>
    %182 = tpu.reciprocal %181 {approx = true} : vector<2x8x1xf32> -> vector<2x8x1xf32>
    %183 = vector.broadcast %182 : vector<2x8x1xf32> to vector<2x8x8xf32>
    %184 = arith.mulf %179, %183 : vector<2x8x8xf32>
    %185 = arith.truncf %184 : vector<2x8x8xf32> to vector<2x8x8xbf16>
    "tpu.trace_start"() <{level = 10 : i32, message = "bqk,bkd->bqd"}> : () -> ()
    %cst_51 = arith.constant dense<0.000000e+00> : vector<2x8x8xf32>
    %186 = tpu.matmul %185, %169, %cst_51 {dimension_numbers = #tpu.dot_dimension_numbers<[2], [1], [1], [2], [0, 0, 0, 1, 1, 2], [0], [0]>} : vector<2x8x8xbf16>, vector<2x8x8xbf16>, vector<2x8x8xf32> -> vector<2x8x8xf32>
    "tpu.trace_stop"() : () -> ()
    %187 = vector.shape_cast %186 : vector<2x8x8xf32> to vector<16x8xf32>
    %188 = arith.truncf %187 : vector<16x8xf32> to vector<16x8xbf16>
    %c0_52 = arith.constant 0 : index
    %c24 = arith.constant 24 : index
    %189 = vector.load %arg17[%c0_52, %c24] : memref<16x32xbf16, #tpu.memory_space<vmem>>, vector<16x8xbf16>
    tpu.vector_store %arg17[%c0_52, %c24], %188 {strides = array<i32>} : memref<16x32xbf16, #tpu.memory_space<vmem>>, vector<16x8xbf16>,
    %c0_53 = arith.constant 0 : index
    %c0_54 = arith.constant 0 : index
    %190 = vector.load %arg17[%c0_53, %c0_54] : memref<16x32xbf16, #tpu.memory_space<vmem>>, vector<16x32xbf16>
    %c0_55 = arith.constant 0 : index
    %c0_56 = arith.constant 0 : index
    %191 = vector.load %arg10[%c0_55, %c0_56] : memref<32x32xbf16, #tpu.memory_space<vmem>>, vector<32x32xbf16>
    %cst_57 = arith.constant dense<0.000000e+00> : vector<16x32xf32>
    %192 = tpu.matmul %190, %191, %cst_57 {dimension_numbers = #tpu.dot_dimension_numbers<[1], [0], [0], [1], [0, 0, 1, 1], [], []>} : vector<16x32xbf16>, vector<32x32xbf16>, vector<16x32xf32> -> vector<16x32xf32>
    %c0_58 = arith.constant 0 : index
    %c0_59 = arith.constant 0 : index
    %193 = vector.load %arg11[%c0_58, %c0_59] : memref<1x32xbf16, #tpu.memory_space<vmem>>, vector<1x32xbf16>
    %194 = arith.extf %193 : vector<1x32xbf16> to vector<1x32xf32>
    %195 = vector.broadcast %194 : vector<1x32xf32> to vector<16x32xf32>
    %196 = arith.addf %192, %195 : vector<16x32xf32>
    %197 = arith.extf %0 : vector<16x32xbf16> to vector<16x32xf32>
    %198 = arith.addf %197, %196 : vector<16x32xf32>
    %cst_60 = arith.constant dense<0.000000e+00> : vector<16xf32>
    %199 = vector.multi_reduction <add>, %198, %cst_60 [1] : vector<16x32xf32> to vector<16xf32>
    %200 = vector.shape_cast %199 : vector<16xf32> to vector<16x1xf32>
    %cst_61 = arith.constant 3.200000e+01 : f32
    %201 = vector.broadcast %cst_61 : f32 to vector<16x1xf32>
    %202 = arith.divf %200, %201 : vector<16x1xf32>
    %203 = vector.broadcast %202 : vector<16x1xf32> to vector<16x32xf32>
    %204 = arith.subf %198, %203 : vector<16x32xf32>
    %205 = vector.broadcast %202 : vector<16x1xf32> to vector<16x32xf32>
    %206 = arith.subf %198, %205 : vector<16x32xf32>
    %207 = arith.mulf %204, %206 : vector<16x32xf32>
    %cst_62 = arith.constant dense<0.000000e+00> : vector<16xf32>
    %208 = vector.multi_reduction <add>, %207, %cst_62 [1] : vector<16x32xf32> to vector<16xf32>
    %209 = vector.shape_cast %208 : vector<16xf32> to vector<16x1xf32>
    %cst_63 = arith.constant 3.200000e+01 : f32
    %210 = vector.broadcast %cst_63 : f32 to vector<16x1xf32>
    %211 = arith.divf %209, %210 : vector<16x1xf32>
    %212 = vector.broadcast %202 : vector<16x1xf32> to vector<16x32xf32>
    %213 = arith.subf %198, %212 : vector<16x32xf32>
    %cst_64 = arith.constant 9.99999974E-6 : f32
    %214 = vector.broadcast %cst_64 : f32 to vector<16x1xf32>
    %215 = arith.addf %211, %214 : vector<16x1xf32>
    %216 = math.rsqrt %215 : vector<16x1xf32>
    %217 = vector.broadcast %216 : vector<16x1xf32> to vector<16x32xf32>
    %218 = arith.mulf %213, %217 : vector<16x32xf32>
    %c0_65 = arith.constant 0 : index
    %c0_66 = arith.constant 0 : index
    %219 = vector.load %arg12[%c0_65, %c0_66] : memref<1x32xbf16, #tpu.memory_space<vmem>>, vector<1x32xbf16>
    %220 = arith.extf %219 : vector<1x32xbf16> to vector<1x32xf32>
    %221 = vector.broadcast %220 : vector<1x32xf32> to vector<16x32xf32>
    %222 = arith.mulf %218, %221 : vector<16x32xf32>
    %c0_67 = arith.constant 0 : index
    %c0_68 = arith.constant 0 : index
    %223 = vector.load %arg13[%c0_67, %c0_68] : memref<1x32xbf16, #tpu.memory_space<vmem>>, vector<1x32xbf16>
    %224 = arith.extf %223 : vector<1x32xbf16> to vector<1x32xf32>
    %225 = vector.broadcast %224 : vector<1x32xf32> to vector<16x32xf32>
    %226 = arith.addf %222, %225 : vector<16x32xf32>
    %227 = arith.truncf %226 : vector<16x32xf32> to vector<16x32xbf16>
    %c0_69 = arith.constant 0 : index
    %c0_70 = arith.constant 0 : index
    %228 = vector.load %arg14[%c0_69, %c0_70] : memref<32x64xbf16, #tpu.memory_space<vmem>>, vector<32x64xbf16>
    %cst_71 = arith.constant dense<0.000000e+00> : vector<16x64xf32>
    %229 = tpu.matmul %227, %228, %cst_71 {dimension_numbers = #tpu.dot_dimension_numbers<[1], [0], [0], [1], [0, 0, 1, 1], [], []>} : vector<16x32xbf16>, vector<32x64xbf16>, vector<16x64xf32> -> vector<16x64xf32>
    %230 = arith.mulf %229, %229 : vector<16x64xf32>
    %231 = arith.mulf %229, %230 : vector<16x64xf32>
    %cst_72 = arith.constant 4.471500e-02 : f32
    %232 = vector.broadcast %cst_72 : f32 to vector<16x64xf32>
    %233 = arith.mulf %232, %231 : vector<16x64xf32>
    %234 = arith.addf %229, %233 : vector<16x64xf32>
    %cst_73 = arith.constant 0.797884583 : f32
    %235 = vector.broadcast %cst_73 : f32 to vector<16x64xf32>
    %236 = arith.mulf %235, %234 : vector<16x64xf32>
    %237 = math.tanh %236 : vector<16x64xf32>
    %cst_74 = arith.constant 1.000000e+00 : f32
    %238 = vector.broadcast %cst_74 : f32 to vector<16x64xf32>
    %239 = arith.addf %238, %237 : vector<16x64xf32>
    %cst_75 = arith.constant 5.000000e-01 : f32
    %240 = vector.broadcast %cst_75 : f32 to vector<16x64xf32>
    %241 = arith.mulf %240, %239 : vector<16x64xf32>
    %242 = arith.mulf %229, %241 : vector<16x64xf32>
    %243 = arith.truncf %242 : vector<16x64xf32> to vector<16x64xbf16>
    %c0_76 = arith.constant 0 : index
    %c0_77 = arith.constant 0 : index
    %244 = vector.load %arg15[%c0_76, %c0_77] : memref<64x32xbf16, #tpu.memory_space<vmem>>, vector<64x32xbf16>
    %cst_78 = arith.constant dense<0.000000e+00> : vector<16x32xf32>
    %245 = tpu.matmul %243, %244, %cst_78 {dimension_numbers = #tpu.dot_dimension_numbers<[1], [0], [0], [1], [0, 0, 1, 1], [], []>} : vector<16x64xbf16>, vector<64x32xbf16>, vector<16x32xf32> -> vector<16x32xf32>
    %246 = arith.addf %198, %245 : vector<16x32xf32>
    %247 = arith.truncf %246 : vector<16x32xf32> to vector<16x32xbf16>
    %c0_79 = arith.constant 0 : index
    %c0_80 = arith.constant 0 : index
    %248 = vector.load %arg16[%c0_79, %c0_80] : memref<16x32xbf16, #tpu.memory_space<vmem>>, vector<16x32xbf16>
    tpu.vector_store %arg16[%c0_79, %c0_80], %247 {strides = array<i32>} : memref<16x32xbf16, #tpu.memory_space<vmem>>, vector<16x32xbf16>,
    return
  }
  func.func @transform_0(%arg0: i32) -> (i32, i32) {
    %c0_i32 = arith.constant 0 : i32
    %c0_i32_0 = arith.constant 0 : i32
    return %arg0, %c0_i32 : i32, i32
  }
  func.func @transform_1(%arg0: i32) -> (i32, i32) {
    %c0_i32 = arith.constant 0 : i32
    %c0_i32_0 = arith.constant 0 : i32
    %c0_i32_1 = arith.constant 0 : i32
    return %c0_i32, %c0_i32_0 : i32, i32
  }
  func.func @transform_2(%arg0: i32) -> (i32, i32) {
    %c0_i32 = arith.constant 0 : i32
    %c0_i32_0 = arith.constant 0 : i32
    %c0_i32_1 = arith.constant 0 : i32
    return %c0_i32, %c0_i32_0 : i32, i32
  }
  func.func @transform_3(%arg0: i32) -> (i32, i32) {
    %c0_i32 = arith.constant 0 : i32
    %c0_i32_0 = arith.constant 0 : i32
    %c0_i32_1 = arith.constant 0 : i32
    return %c0_i32, %c0_i32_0 : i32, i32
  }
  func.func @transform_4(%arg0: i32) -> (i32, i32) {
    %c0_i32 = arith.constant 0 : i32
    %c0_i32_0 = arith.constant 0 : i32
    %c0_i32_1 = arith.constant 0 : i32
    return %c0_i32, %c0_i32_0 : i32, i32
  }
  func.func @transform_5(%arg0: i32) -> (i32, i32) {
    %c0_i32 = arith.constant 0 : i32
    %c0_i32_0 = arith.constant 0 : i32
    %c0_i32_1 = arith.constant 0 : i32
    return %c0_i32, %c0_i32_0 : i32, i32
  }
  func.func @transform_6(%arg0: i32) -> (i32, i32) {
    %c0_i32 = arith.constant 0 : i32
    %c0_i32_0 = arith.constant 0 : i32
    %c0_i32_1 = arith.constant 0 : i32
    return %c0_i32, %c0_i32_0 : i32, i32
  }
  func.func @transform_7(%arg0: i32) -> (i32, i32) {
    %c0_i32 = arith.constant 0 : i32
    %c0_i32_0 = arith.constant 0 : i32
    %c0_i32_1 = arith.constant 0 : i32
    return %c0_i32, %c0_i32_0 : i32, i32
  }
  func.func @transform_8(%arg0: i32) -> (i32, i32) {
    %c0_i32 = arith.constant 0 : i32
    %c0_i32_0 = arith.constant 0 : i32
    %c0_i32_1 = arith.constant 0 : i32
    return %c0_i32, %c0_i32_0 : i32, i32
  }
  func.func @transform_9(%arg0: i32) -> (i32, i32) {
    %c0_i32 = arith.constant 0 : i32
    %c0_i32_0 = arith.constant 0 : i32
    %c0_i32_1 = arith.constant 0 : i32
    return %c0_i32, %c0_i32_0 : i32, i32
  }
  func.func @transform_10(%arg0: i32) -> (i32, i32) {
    %c0_i32 = arith.constant 0 : i32
    %c0_i32_0 = arith.constant 0 : i32
    %c0_i32_1 = arith.constant 0 : i32
    return %c0_i32, %c0_i32_0 : i32, i32
  }
  func.func @transform_11(%arg0: i32) -> (i32, i32) {
    %c0_i32 = arith.constant 0 : i32
    %c0_i32_0 = arith.constant 0 : i32
    %c0_i32_1 = arith.constant 0 : i32
    return %c0_i32, %c0_i32_0 : i32, i32
  }
  func.func @transform_12(%arg0: i32) -> (i32, i32) {
    %c0_i32 = arith.constant 0 : i32
    %c0_i32_0 = arith.constant 0 : i32
    %c0_i32_1 = arith.constant 0 : i32
    return %c0_i32, %c0_i32_0 : i32, i32
  }
  func.func @transform_13(%arg0: i32) -> (i32, i32) {
    %c0_i32 = arith.constant 0 : i32
    %c0_i32_0 = arith.constant 0 : i32
    %c0_i32_1 = arith.constant 0 : i32
    return %c0_i32, %c0_i32_0 : i32, i32
  }
  func.func @transform_14(%arg0: i32) -> (i32, i32) {
    %c0_i32 = arith.constant 0 : i32
    %c0_i32_0 = arith.constant 0 : i32
    %c0_i32_1 = arith.constant 0 : i32
    return %c0_i32, %c0_i32_0 : i32, i32
  }
  func.func @transform_15(%arg0: i32) -> (i32, i32) {
    %c0_i32 = arith.constant 0 : i32
    %c0_i32_0 = arith.constant 0 : i32
    return %arg0, %c0_i32 : i32, i32
  }
}

</mosaic_0001>

<llo_original>
// kernel: tpu_custom_call.1
$region0: #{tpu_custom_call.1}
  #allocation0 [shape = 'u32[]', space=smem, size = 0x4, offset = 0x4, fixed_abs, tag = 'smem constant byte address 0x4 - core index']
  #allocation1 [shape = 'u32[144,128]{1,0:T(1,128)}', space=vmem, size = 0x12000, scoped, tag = 'internal scratch']
  #allocation2 [shape = 'bf16[16,32]{1,0:T(16,128)(2,1)}', space=vmem, size = 0x1000, scoped, tag = 'scratch operand']
  %s0 = inlined_call_operand.hbm [shape: bf16[16,32], index: 0, kind: input, shape index: {}]
  %s1 = inlined_call_operand.hbm [shape: bf16[16,32], index: 1, kind: input, shape index: {}]
  %s2 = inlined_call_operand.vmem [shape: bf16[32,96], index: 2, kind: input, shape index: {}]
  %s3 = inlined_call_operand.vmem [shape: bf16[1,96], index: 3, kind: input, shape index: {}]
  %s4 = inlined_call_operand.hbm [shape: bf16[3,96], index: 4, kind: input, shape index: {}]
  %s5 = inlined_call_operand.hbm [shape: bf16[1,96], index: 5, kind: input, shape index: {}]
  %s6 = inlined_call_operand.vmem [shape: f32[16,32], index: 6, kind: input, shape index: {}]
  %s7 = inlined_call_operand.vmem [shape: f32[16,32], index: 7, kind: input, shape index: {}]
  %s8 = inlined_call_operand.hbm [shape: f32[16,32], index: 8, kind: input, shape index: {}]
  %s9 = inlined_call_operand.vmem [shape: bf16[32,32], index: 9, kind: input, shape index: {}]
  %s10 = inlined_call_operand.hbm [shape: bf16[1,32], index: 10, kind: input, shape index: {}]
  %s11 = inlined_call_operand.hbm [shape: bf16[1,32], index: 11, kind: input, shape index: {}]
  %s12 = inlined_call_operand.hbm [shape: bf16[1,32], index: 12, kind: input, shape index: {}]
  %s13 = inlined_call_operand.vmem [shape: bf16[32,64], index: 13, kind: input, shape index: {}]
  %s14 = inlined_call_operand.vmem [shape: bf16[64,32], index: 14, kind: input, shape index: {}]
  %s15 = inlined_call_operand.hbm [shape: bf16[16,32], index: 15, kind: output, shape index: {}]
  %s16 = sld [smem:[#allocation0]]
  $region102: #{tpu_custom_call.1} parent=0
    _
  %s18 = ssub.s32 1, %s16
  %s19 = scalar_select 0, %s18, %s16
  $region1: #{tpu_custom_call.1} parent=0
    #allocation3 [shape = 'u8[4096]{0}', space=vmem, size = 0x1000, scoped, tag = 'input window, operand 0, single buffered']
    #allocation4 [shape = 's32[1]{0}', space=sflag, size = 0x4, scoped, tag = 'scoped memory for tpu_custom_call.1']
    #allocation5 [shape = 's32[1]{0}', space=sflag, size = 0x4, scoped, tag = 'scoped memory for tpu_custom_call.1']
    #allocation6 [shape = 'u8[4096]{0}', space=vmem, size = 0x1000, scoped, tag = 'input window, operand 1, single buffered']
    #allocation7 [shape = 's32[1]{0}', space=sflag, size = 0x4, scoped, tag = 'scoped memory for tpu_custom_call.1']
    #allocation8 [shape = 'u8[1024]{0}', space=vmem, size = 0x400, scoped, tag = 'input window, operand 4, single buffered']
    #allocation9 [shape = 'u8[512]{0}', space=vmem, size = 0x400, scoped, tag = 'input window, operand 5, single buffered']
    #allocation10 [shape = 's32[1]{0}', space=sflag, size = 0x4, scoped, tag = 'scoped memory for tpu_custom_call.1']
    #allocation11 [shape = 'u8[8192]{0}', space=vmem, size = 0x2000, scoped, tag = 'input window, operand 8, single buffered']
    #allocation12 [shape = 'u8[512]{0}', space=vmem, size = 0x400, scoped, tag = 'input window, operand 10, single buffered']
    #allocation13 [shape = 's32[1]{0}', space=sflag, size = 0x4, scoped, tag = 'scoped memory for tpu_custom_call.1']
    #allocation14 [shape = 'u8[512]{0}', space=vmem, size = 0x400, scoped, tag = 'input window, operand 11, single buffered']
    #allocation15 [shape = 'u8[512]{0}', space=vmem, size = 0x400, scoped, tag = 'input window, operand 12, single buffered']
    #allocation16 [shape = 's32[1]{0}', space=sflag, size = 0x4, scoped, tag = 'scoped memory for tpu_custom_call.1']
    #allocation17 [shape = 'u8[4096]{0}', space=vmem, size = 0x1000, scoped, tag = 'output window, operand 0, single buffered']
    %20 = vsyncpa [#allocation4], 0
    %21 = vsyncpa [#allocation7], 0
    %22 = vsyncpa [#allocation10], 0
    %23 = vsyncpa [#allocation13], 0
    %24 = vsyncpa [#allocation16], 0
    %25 = vsyncpa [#allocation5], 0
    // Predicated region
    $region2: #{tpu_custom_call.1} parent=1 // pred_check
      _
    $region3: #{tpu_custom_call.1} parent=1 // pred_check_branch
      %27 = sbr.rel (0) target = $region5
    $region4: #{tpu_custom_call.1} parent=1 // pred_region
      %s29 = ssub.s32 128, 128
      %30 = vsyncadd [#allocation4], %s29
      %s31 = sshll.u32 [#allocation3], 4
      %s32 = int_to_ptr.vmem [resolvable:$true] %s31
      %37 = dma.hbm_to_vmem [thread:$0]  %s0, 128, %s32, [#allocation4], 64, 64, 4
    $region5: #{tpu_custom_call.1} parent=1 // pred_fallthru
      _
    // Predicated region
    $region6: #{tpu_custom_call.1} parent=1 // pred_check
      _
    $region7: #{tpu_custom_call.1} parent=1 // pred_check_branch
      %39 = sbr.rel (0) target = $region9
    $region8: #{tpu_custom_call.1} parent=1 // pred_region
      %s41 = ssub.s32 128, 128
      %42 = vsyncadd [#allocation7], %s41
      %s43 = sshll.u32 [#allocation6], 4
      %s44 = int_to_ptr.vmem [resolvable:$true] %s43
      %49 = dma.hbm_to_vmem [thread:$0]  %s1, 128, %s44, [#allocation7], 64, 64, 4
    $region9: #{tpu_custom_call.1} parent=1 // pred_fallthru
      _
    // Predicated region
    $region10: #{tpu_custom_call.1} parent=1 // pred_check
      _
    $region11: #{tpu_custom_call.1} parent=1 // pred_check_branch
      %51 = sbr.rel (0) target = $region13
    $region12: #{tpu_custom_call.1} parent=1 // pred_region
      _
    $region13: #{tpu_custom_call.1} parent=1 // pred_fallthru
      _
    // Predicated region
    $region14: #{tpu_custom_call.1} parent=1 // pred_check
      _
    $region15: #{tpu_custom_call.1} parent=1 // pred_check_branch
      %53 = sbr.rel (0) target = $region17
    $region16: #{tpu_custom_call.1} parent=1 // pred_region
      _
    $region17: #{tpu_custom_call.1} parent=1 // pred_fallthru
      _
    // Predicated region
    $region18: #{tpu_custom_call.1} parent=1 // pred_check
      _
    $region19: #{tpu_custom_call.1} parent=1 // pred_check_branch
      %55 = sbr.rel (0) target = $region21
    $region20: #{tpu_custom_call.1} parent=1 // pred_region
      %s57 = ssub.s32 32, 32
      %58 = vsyncadd [#allocation7], %s57
      %s60 = sshll.u32 [#allocation8], 4
      %s61 = int_to_ptr.vmem [resolvable:$true] %s60
      %63 = dma.hbm_to_vmem [thread:$0]  %s4, 32, %s61, [#allocation7]
    $region21: #{tpu_custom_call.1} parent=1 // pred_fallthru
      _
    // Predicated region
    $region22: #{tpu_custom_call.1} parent=1 // pred_check
      _
    $region23: #{tpu_custom_call.1} parent=1 // pred_check_branch
      %65 = sbr.rel (0) target = $region25
    $region24: #{tpu_custom_call.1} parent=1 // pred_region
      %s67 = ssub.s32 16, 16
      %68 = vsyncadd [#allocation10], %s67
      %s70 = sshll.u32 [#allocation9], 4
      %s71 = int_to_ptr.vmem [resolvable:$true] %s70
      %73 = dma.hbm_to_vmem [thread:$0]  %s5, 16, %s71, [#allocation10]
    $region25: #{tpu_custom_call.1} parent=1 // pred_fallthru
      _
    // Predicated region
    $region26: #{tpu_custom_call.1} parent=1 // pred_check
      _
    $region27: #{tpu_custom_call.1} parent=1 // pred_check_branch
      %75 = sbr.rel (0) target = $region29
    $region28: #{tpu_custom_call.1} parent=1 // pred_region
      _
    $region29: #{tpu_custom_call.1} parent=1 // pred_fallthru
      _
    // Predicated region
    $region30: #{tpu_custom_call.1} parent=1 // pred_check
      _
    $region31: #{tpu_custom_call.1} parent=1 // pred_check_branch
      %77 = sbr.rel (0) target = $region33
    $region32: #{tpu_custom_call.1} parent=1 // pred_region
      _
    $region33: #{tpu_custom_call.1} parent=1 // pred_fallthru
      _
    // Predicated region
    $region34: #{tpu_custom_call.1} parent=1 // pred_check
      _
    $region35: #{tpu_custom_call.1} parent=1 // pred_check_branch
      %79 = sbr.rel (0) target = $region37
    $region36: #{tpu_custom_call.1} parent=1 // pred_region
      %s81 = ssub.s32 256, 256
      %82 = vsyncadd [#allocation10], %s81
      %s83 = sshll.u32 [#allocation11], 4
      %s84 = int_to_ptr.vmem [resolvable:$true] %s83
      %89 = dma.hbm_to_vmem [thread:$0]  %s8, 256, %s84, [#allocation10], 128, 128, 8
    $region37: #{tpu_custom_call.1} parent=1 // pred_fallthru
      _
    // Predicated region
    $region38: #{tpu_custom_call.1} parent=1 // pred_check
      _
    $region39: #{tpu_custom_call.1} parent=1 // pred_check_branch
      %91 = sbr.rel (0) target = $region41
    $region40: #{tpu_custom_call.1} parent=1 // pred_region
      _
    $region41: #{tpu_custom_call.1} parent=1 // pred_fallthru
      _
    // Predicated region
    $region42: #{tpu_custom_call.1} parent=1 // pred_check
      _
    $region43: #{tpu_custom_call.1} parent=1 // pred_check_branch
      %93 = sbr.rel (0) target = $region45
    $region44: #{tpu_custom_call.1} parent=1 // pred_region
      %s95 = ssub.s32 16, 16
      %96 = vsyncadd [#allocation13], %s95
      %s98 = sshll.u32 [#allocation12], 4
      %s99 = int_to_ptr.vmem [resolvable:$true] %s98
      %101 = dma.hbm_to_vmem [thread:$0]  %s10, 16, %s99, [#allocation13]
    $region45: #{tpu_custom_call.1} parent=1 // pred_fallthru
      _
    // Predicated region
    $region46: #{tpu_custom_call.1} parent=1 // pred_check
      _
    $region47: #{tpu_custom_call.1} parent=1 // pred_check_branch
      %103 = sbr.rel (0) target = $region49
    $region48: #{tpu_custom_call.1} parent=1 // pred_region
      %s105 = ssub.s32 16, 16
      %106 = vsyncadd [#allocation13], %s105
      %s108 = sshll.u32 [#allocation14], 4
      %s109 = int_to_ptr.vmem [resolvable:$true] %s108
      %111 = dma.hbm_to_vmem [thread:$0]  %s11, 16, %s109, [#allocation13]
    $region49: #{tpu_custom_call.1} parent=1 // pred_fallthru
      _
    // Predicated region
    $region50: #{tpu_custom_call.1} parent=1 // pred_check
      _
    $region51: #{tpu_custom_call.1} parent=1 // pred_check_branch
      %113 = sbr.rel (0) target = $region53
    $region52: #{tpu_custom_call.1} parent=1 // pred_region
      %s115 = ssub.s32 16, 16
      %116 = vsyncadd [#allocation16], %s115
      %s118 = sshll.u32 [#allocation15], 4
      %s119 = int_to_ptr.vmem [resolvable:$true] %s118
      %121 = dma.hbm_to_vmem [thread:$0]  %s12, 16, %s119, [#allocation16]
    $region53: #{tpu_custom_call.1} parent=1 // pred_fallthru
      _
    // Predicated region
    $region54: #{tpu_custom_call.1} parent=1 // pred_check
      _
    $region55: #{tpu_custom_call.1} parent=1 // pred_check_branch
      %123 = sbr.rel (0) target = $region57
    $region56: #{tpu_custom_call.1} parent=1 // pred_region
      _
    $region57: #{tpu_custom_call.1} parent=1 // pred_fallthru
      _
    // Predicated region
    $region58: #{tpu_custom_call.1} parent=1 // pred_check
      _
    $region59: #{tpu_custom_call.1} parent=1 // pred_check_branch
      %125 = sbr.rel (0) target = $region61
    $region60: #{tpu_custom_call.1} parent=1 // pred_region
      _
    $region61: #{tpu_custom_call.1} parent=1 // pred_fallthru
      _
    // Predicated region
    $region62: #{tpu_custom_call.1} parent=1 // pred_check
      _
    $region63: #{tpu_custom_call.1} parent=1 // pred_check_branch
      %127 = sbr.rel (0) target = $region65
    $region64: #{tpu_custom_call.1} parent=1 // pred_region
      %128 = dma.done [#allocation4], 128
    $region65: #{tpu_custom_call.1} parent=1 // pred_fallthru
      _
    // Predicated region
    $region66: #{tpu_custom_call.1} parent=1 // pred_check
      _
    $region67: #{tpu_custom_call.1} parent=1 // pred_check_branch
      %130 = sbr.rel (0) target = $region69
    $region68: #{tpu_custom_call.1} parent=1 // pred_region
      %131 = dma.done [#allocation7], 128
    $region69: #{tpu_custom_call.1} parent=1 // pred_fallthru
      _
    // Predicated region
    $region70: #{tpu_custom_call.1} parent=1 // pred_check
      _
    $region71: #{tpu_custom_call.1} parent=1 // pred_check_branch
      %133 = sbr.rel (0) target = $region73
    $region72: #{tpu_custom_call.1} parent=1 // pred_region
      %134 = dma.done [#allocation7], 32
    $region73: #{tpu_custom_call.1} parent=1 // pred_fallthru
      _
    // Predicated region
    $region74: #{tpu_custom_call.1} parent=1 // pred_check
      _
    $region75: #{tpu_custom_call.1} parent=1 // pred_check_branch
      %136 = sbr.rel (0) target = $region77
    $region76: #{tpu_custom_call.1} parent=1 // pred_region
      %137 = dma.done [#allocation10], 16
    $region77: #{tpu_custom_call.1} parent=1 // pred_fallthru
      _
    // Predicated region
    $region78: #{tpu_custom_call.1} parent=1 // pred_check
      _
    $region79: #{tpu_custom_call.1} parent=1 // pred_check_branch
      %139 = sbr.rel (0) target = $region81
    $region80: #{tpu_custom_call.1} parent=1 // pred_region
      %140 = dma.done [#allocation10], 256
    $region81: #{tpu_custom_call.1} parent=1 // pred_fallthru
      _
    // Predicated region
    $region82: #{tpu_custom_call.1} parent=1 // pred_check
      _
    $region83: #{tpu_custom_call.1} parent=1 // pred_check_branch
      %142 = sbr.rel (0) target = $region85
    $region84: #{tpu_custom_call.1} parent=1 // pred_region
      %143 = dma.done [#allocation13], 16
    $region85: #{tpu_custom_call.1} parent=1 // pred_fallthru
      _
    // Predicated region
    $region86: #{tpu_custom_call.1} parent=1 // pred_check
      _
    $region87: #{tpu_custom_call.1} parent=1 // pred_check_branch
      %145 = sbr.rel (0) target = $region89
    $region88: #{tpu_custom_call.1} parent=1 // pred_region
      %146 = dma.done [#allocation13], 16
    $region89: #{tpu_custom_call.1} parent=1 // pred_fallthru
      _
    // Predicated region
    $region90: #{tpu_custom_call.1} parent=1 // pred_check
      _
    $region91: #{tpu_custom_call.1} parent=1 // pred_check_branch
      %148 = sbr.rel (0) target = $region93
    $region92: #{tpu_custom_call.1} parent=1 // pred_region
      %149 = dma.done [#allocation16], 16
    $region93: #{tpu_custom_call.1} parent=1 // pred_fallthru
      _
    %v151 = vld [vmem:[#allocation3] sm:$0xf]
    %v152 = vld [vmem:[#allocation3 + $0x4] sm:$0xf]
    %v153 = vld [vmem:[#allocation6] sm:$0xf]
    %v154 = vld [vmem:[#allocation6 + $0x4] sm:$0xf]
    %v155 = vadd.bf16 %v151, %v153
    %v156 = vadd.bf16 %v152, %v154
    %v157 = vld [vmem:[%s2] sm:$0xf]
    %v158 = vld [vmem:[%s2 + $0x4] sm:$0xf]
    %v159 = vld [vmem:[%s2 + $0x8] sm:$0xf]
    %v160 = vld [vmem:[%s2 + $0xc] sm:$0xf]
    %v161 = vld [vmem:[%s3] sm:$0x1]
    %v162 = vunpack.c.l.bf16 %v161
    %v163 = vlaneseq
    %v164 = vshrl.u32 %v163, 7
    %v165 = vsub.s32 0, %v164
    %v166 = vrot.slane %v162, %v165
    %v169 = vunpack.c.l.b16 %v155
    %v170 = vunpack.c.l.b16 %v156
    %v171 = vpack.c.b16 %v170, %v169
    %v176 = vunpack.c.l.b16 %v157
    %v177 = vunpack.c.l.b16 %v158
    %v178 = vunpack.c.l.b16 %v159
    %v179 = vunpack.c.l.b16 %v160
    %v180 = vpack.c.b16 %v177, %v176
    %v181 = vpack.c.b16 %v179, %v178
    %vm184 = vcmask 261120
    %v186 = vsel %vm184, %v171, 0
    %188 = vmatprep.subr.bf16.mxu0 0
    %189 = vmatpush1.bf16.msra.mxu0 %v180
    %190 = vmatprep.subr.bf16.mxu0 0
    %191 = vmatpush1.bf16.msra.mxu0 %v181
    %192 = vmatprep.subr.bf16.mxu0 0
    %193 = vmatpush1.bf16.msra.mxu0 0
    %194 = vmatprep.subr.bf16.mxu0 0
    %195 = vmatpush1.bf16.msra.mxu0 0
    %196 = vmatprep.subr.bf16.mxu0 0
    %197 = vmatpush1.bf16.msra.mxu0 0
    %198 = vmatprep.subr.bf16.mxu0 0
    %199 = vmatpush1.bf16.msra.mxu0 0
    %200 = vmatprep.subr.bf16.mxu0 0
    %201 = vmatpush1.bf16.msra.mxu0 0
    %202 = vmatprep.subr.bf16.mxu0 0
    %203 = vmatpush1.bf16.msra.mxu0 0
    %204 = vmatprep.subr.bf16.mxu0 0
    %205 = vmatpush1.bf16.msra.mxu0 0
    %206 = vmatprep.subr.bf16.mxu0 0
    %207 = vmatpush1.bf16.msra.mxu0 0
    %208 = vmatprep.subr.bf16.mxu0 0
    %209 = vmatpush1.bf16.msra.mxu0 0
    %210 = vmatprep.subr.bf16.mxu0 0
    %211 = vmatpush1.bf16.msra.mxu0 0
    %212 = vmatprep.subr.bf16.mxu0 0
    %213 = vmatpush1.bf16.msra.mxu0 0
    %214 = vmatprep.subr.bf16.mxu0 0
    %215 = vmatpush1.bf16.msra.mxu0 0
    %216 = vmatprep.subr.bf16.mxu0 0
    %217 = vmatpush1.bf16.msra.mxu0 0
    %218 = vmatprep.subr.bf16.mxu0 0
    %219 = vmatpush1.bf16.msra.mxu0 0
    %220 = vmatprep.mubr.bf16.mxu0 0
    %221 = vmatmul.mubr.bf16.gmra.mrb[0].mxu0 %v186
    %v222 = vpop.f32.mrb[0].mxu0
    %v223 = vadd.f32 %v166, %v222
    %v224 = vpop.f32.mrb[0].mxu0
    %v225 = vpop.f32.mrb[0].mxu0
    %v226 = vadd.f32 %v166, %v225
    %v227 = vpop.f32.mrb[0].mxu0
    %228 = vdwg.mxu0
    %v229 = vlaneseq
    %v230 = vshrl.u32 %v229, 7
    %v231 = vadd.s32 %v230, 8
    %vm232 = vcmp.lt.s32.totalorder %v230, 0
    %v233 = vsub.s32 0, %v230
    %v234 = vsel %vm232, %v233, %v230
    %v235 = vshrl.u32 %v234, 3
    %v236 = vand.u32 %v234, 7
    %v237 = vsub.s32 0, %v236
    %v238 = vsel %vm232, %v237, %v236
    %vm239 = vcmp.lt.s32.totalorder %v231, 0
    %v240 = vsub.s32 0, %v231
    %v241 = vsel %vm239, %v240, %v231
    %v242 = vshrl.u32 %v241, 3
    %v243 = vand.u32 %v241, 7
    %v244 = vsub.s32 0, %v243
    %v245 = vsel %vm239, %v244, %v243
    %vm246 = vcmp.ne.s32.totalorder %v238, 0
    %vm247 = vcmp.ne.s32.totalorder %v245, 0
    %vm248 = vcmp.lt.s32.totalorder %v238, 0
    %vm249 = vcmp.lt.s32.totalorder %v245, 0
    %vm250 = vmand %vm248, %vm246
    %vm251 = vmand %vm249, %vm247
    %v252 = vadd.s32 %v238, 8
    %v253 = vadd.s32 %v245, 8
    %v254 = vsel %vm250, %v252, %v238
    %v255 = vsel %vm251, %v253, %v245
    %vm256 = vcmp.ge.s32.totalorder %v254, 1
    %vm257 = vcmp.ge.s32.totalorder %v255, 1
    %v258 = vrot.slane %v223, 7
    %v259 = vrot.slane %v226, 7
    %vm260 = vcmp.lt.s32.totalorder %v230, 1
    %v261 = vsel %vm260, %v258, %v259
    %v262 = vsel %vm260, %v259, %v258
    %v263 = vsel %vm256, 1, 0
    %v264 = vsel %vm257, 1, 0
    %vm265 = vcmp.eq.s32.totalorder %v263, 1
    %vm266 = vcmp.eq.s32.totalorder %v264, 1
    %v267 = vsel %vm265, %v262, 0.0
    %v268 = vsel %vm266, %v261, 0.0
    %vm269 = vcmp.ge.s32.totalorder %v254, 2
    %vm270 = vcmp.ge.s32.totalorder %v255, 2
    %v271 = vrot.slane %v223, 6
    %v272 = vrot.slane %v226, 6
    %vm273 = vcmp.lt.s32.totalorder %v230, 2
    %v274 = vsel %vm273, %v271, %v272
    %v275 = vsel %vm273, %v272, %v271
    %v276 = vsel %vm269, 1, 0
    %v277 = vsel %vm270, 1, 0
    %vm278 = vcmp.eq.s32.totalorder %v276, 1
    %vm279 = vcmp.eq.s32.totalorder %v277, 1
    %v280 = vsel %vm278, %v275, 0.0
    %v281 = vsel %vm279, %v274, 0.0
    %v282 = vld [vmem:[#allocation8] sm:$0x3]
    %v283 = vunpack.c.l.bf16 %v282
    %v284 = vlaneseq
    %v285 = vshrl.u32 %v284, 7
    %v286 = vsub.s32 0, %v285
    %v287 = vrot.slane %v283, %v286
    %v288 = vmul.f32 %v280, %v287
    %v289 = vmul.f32 %v281, %v287
    %v290 = vlaneseq
    %v291 = vshrl.u32 %v290, 7
    %v292 = vsub.s32 1, %v291
    %v293 = vrot.slane %v283, %v292
    %v294 = vmul.f32 %v267, %v293
    %v295 = vmul.f32 %v268, %v293
    %v296 = vadd.f32 %v288, %v294
    %v297 = vadd.f32 %v289, %v295
    %v298 = vlaneseq
    %v299 = vshrl.u32 %v298, 7
    %v300 = vsub.s32 2, %v299
    %v301 = vrot.slane %v283, %v300
    %v302 = vmul.f32 %v223, %v301
    %v303 = vmul.f32 %v226, %v301
    %v304 = vadd.f32 %v296, %v302
    %v305 = vadd.f32 %v297, %v303
    %v306 = vld [vmem:[#allocation9] sm:$0x1]
    %v307 = vunpack.c.l.bf16 %v306
    %v308 = vlaneseq
    %v309 = vshrl.u32 %v308, 7
    %v310 = vsub.s32 0, %v309
    %v311 = vrot.slane %v307, %v310
    %v312 = vadd.f32 %v304, %v311
    %v313 = vadd.f32 %v305, %v311
    %v314 = vld [vmem:[%s6] sm:$0xff]
    %v315 = vld [vmem:[%s6 + $0x8] sm:$0xff]
    %v316 = vld [vmem:[%s7] sm:$0xff]
    %v317 = vld [vmem:[%s7 + $0x8] sm:$0xff]
    %v318 = vld [vmem:[#allocation11] sm:$0xff]
    %v319 = vld [vmem:[#allocation11 + $0x8] sm:$0xff]
    %v320 = vmul.f32 %v312, %v314
    %v321 = vmul.f32 %v313, %v315
    %vm322 = vcmask 1047808
    %323 = vrot.lane.b32.xlu0 %v312, 32
    %v324 = vpop.permute.xlu0 %323
    %v325 = vsel %vm322, %v324, %v312
    %326 = vrot.lane.b32.xlu0 %v313, 32
    %v327 = vpop.permute.xlu0 %326
    %v328 = vsel %vm322, %v327, %v313
    %329 = vrot.lane.b32.xlu0 %v325, 32
    %v330 = vpop.permute.xlu0 %329
    %331 = vrot.lane.b32.xlu0 %v328, 32
    %v332 = vpop.permute.xlu0 %331
    %v333 = vsel %vm322, %v330, %v312
    %v334 = vsel %vm322, %v332, %v313
    %337 = vrot.lane.b32.xlu0 %v316, 4
    %v338 = vpop.permute.xlu0 %337
    %339 = vrot.lane.b32.xlu0 %v317, 4
    %v340 = vpop.permute.xlu0 %339
    %v343 = vmul.f32 %v333, %v338
    %v344 = vmul.f32 %v334, %v340
    %347 = vrot.lane.b32.xlu0 %v343, 124
    %v348 = vpop.permute.xlu0 %347
    %349 = vrot.lane.b32.xlu0 %v344, 124
    %v350 = vpop.permute.xlu0 %349
    %v353 = vadd.f32 %v320, %v348
    %v354 = vadd.f32 %v321, %v350
    %357 = vrot.lane.b32.xlu0 %v318, 28
    %v358 = vpop.permute.xlu0 %357
    %359 = vrot.lane.b32.xlu0 %v319, 28
    %v360 = vpop.permute.xlu0 %359
    %v363 = vmul.f32 %v333, %v358
    %v364 = vmul.f32 %v334, %v360
    %367 = vrot.lane.b32.xlu0 %v363, 100
    %v368 = vpop.permute.xlu0 %367
    %369 = vrot.lane.b32.xlu0 %v364, 100
    %v370 = vpop.permute.xlu0 %369
    %v373 = vadd.f32 %v353, %v368
    %v374 = vadd.f32 %v354, %v370
    %v375 = vmul.f32 %v373, 0.35355338
    %v376 = vmul.f32 %v374, 0.35355338
    %v377 = vpack.c.bf16 %v376, %v375
    %380 = vrot.lane.b32.xlu0 %v314, 32
    %v381 = vpop.permute.xlu0 %380
    %382 = vrot.lane.b32.xlu0 %v315, 32
    %v383 = vpop.permute.xlu0 %382
    %v386 = vmul.f32 %v312, %v381
    %v387 = vmul.f32 %v313, %v383
    %390 = vrot.lane.b32.xlu0 %v312, 96
    %v391 = vpop.permute.xlu0 %390
    %392 = vrot.lane.b32.xlu0 %v313, 96
    %v393 = vpop.permute.xlu0 %392
    %396 = vrot.lane.b32.xlu0 %v391, 32
    %v397 = vpop.permute.xlu0 %396
    %v398 = vsel %vm322, %v397, %v391
    %399 = vrot.lane.b32.xlu0 %v393, 32
    %v400 = vpop.permute.xlu0 %399
    %v401 = vsel %vm322, %v400, %v393
    %402 = vrot.lane.b32.xlu0 %v398, 32
    %v403 = vpop.permute.xlu0 %402
    %404 = vrot.lane.b32.xlu0 %v401, 32
    %v405 = vpop.permute.xlu0 %404
    %v406 = vsel %vm322, %v403, %v391
    %v407 = vsel %vm322, %v405, %v393
    %v408 = vmul.f32 %v406, %v338
    %v409 = vmul.f32 %v407, %v340
    %412 = vrot.lane.b32.xlu0 %v408, 28
    %v413 = vpop.permute.xlu0 %412
    %414 = vrot.lane.b32.xlu0 %v409, 28
    %v415 = vpop.permute.xlu0 %414
    %v418 = vadd.f32 %v386, %v413
    %v419 = vadd.f32 %v387, %v415
    %v420 = vmul.f32 %v406, %v358
    %v421 = vmul.f32 %v407, %v360
    %424 = vrot.lane.b32.xlu0 %v420, 4
    %v425 = vpop.permute.xlu0 %424
    %426 = vrot.lane.b32.xlu0 %v421, 4
    %v427 = vpop.permute.xlu0 %426
    %v430 = vadd.f32 %v418, %v425
    %v431 = vadd.f32 %v419, %v427
    %v432 = vpack.c.bf16 %v431, %v430
    %v433 = vpack.c.bf16 %v313, %v312
    %v434 = vlaneseq
    %v435 = vand.u32 %v434, 127
    %vm436 = vcmp.le.s32.totalorder %v435, %v230
    %v438 = vunpack.c.l.b16 %v377
    %v439 = vunpack.c.h.b16 %v377
    %v440 = vpack.c.b16 %v438, %v438
    %v441 = vpack.c.b16 %v439, %v439
    %v443 = vunpack.c.l.b16 %v432
    %v444 = vunpack.c.h.b16 %v432
    %v446 = vunpack.c.l.b16 %v433
    %v447 = vunpack.c.h.b16 %v433
    %v448 = vpack.c.b16 %v443, %v443
    %449 = vrot.lane.b32.xlu0 %v448, 96
    %v450 = vpop.permute.xlu0 %449
    %vm451 = vcmask 64512
    %v453 = vsel %vm451, %v440, 0
    %v456 = vsel %vm451, %v450, 0
    %458 = vmatprep.subr.bf16.mxu0 0
    %459 = vmatpush1.bf16.xpose.msra.mxu0 %v456
    %460 = vmatprep.subr.bf16.mxu0 0
    %461 = vmatpush1.bf16.xpose.msra.mxu0 0
    %462 = vmatprep.subr.bf16.mxu0 0
    %463 = vmatpush1.bf16.xpose.msra.mxu0 0
    %464 = vmatprep.subr.bf16.mxu0 0
    %465 = vmatpush1.bf16.xpose.msra.mxu0 0
    %466 = vmatprep.subr.bf16.mxu0 0
    %467 = vmatpush1.bf16.xpose.msra.mxu0 0
    %468 = vmatprep.subr.bf16.mxu0 0
    %469 = vmatpush1.bf16.xpose.msra.mxu0 0
    %470 = vmatprep.subr.bf16.mxu0 0
    %471 = vmatpush1.bf16.xpose.msra.mxu0 0
    %472 = vmatprep.subr.bf16.mxu0 0
    %473 = vmatpush1.bf16.xpose.msra.mxu0 0
    %474 = vmatprep.subr.bf16.mxu0 0
    %475 = vmatpush1.bf16.xpose.msra.mxu0 0
    %476 = vmatprep.subr.bf16.mxu0 0
    %477 = vmatpush1.bf16.xpose.msra.mxu0 0
    %478 = vmatprep.subr.bf16.mxu0 0
    %479 = vmatpush1.bf16.xpose.msra.mxu0 0
    %480 = vmatprep.subr.bf16.mxu0 0
    %481 = vmatpush1.bf16.xpose.msra.mxu0 0
    %482 = vmatprep.subr.bf16.mxu0 0
    %483 = vmatpush1.bf16.xpose.msra.mxu0 0
    %484 = vmatprep.subr.bf16.mxu0 0
    %485 = vmatpush1.bf16.xpose.msra.mxu0 0
    %486 = vmatprep.subr.bf16.mxu0 0
    %487 = vmatpush1.bf16.xpose.msra.mxu0 0
    %488 = vmatprep.subr.bf16.mxu0 0
    %489 = vmatpush1.bf16.xpose.msra.mxu0 0
    %490 = vmatprep.mubr.bf16.mxu0 0
    %491 = vmatmul.mubr.bf16.gmra.mrb[0].mxu0 %v453
    %v492 = vpop.f32.mrb[0].mxu0
    %v493 = vadd.f32 0.0, %v492
    %v494 = vpop.f32.mrb[0].mxu0
    %v495 = vpop.f32.mrb[0].mxu0
    %v496 = vpop.f32.mrb[0].mxu0
    %497 = vdwg.mxu0
    %v498 = vpack.c.b16 %v444, %v444
    %499 = vrot.lane.b32.xlu0 %v498, 96
    %v500 = vpop.permute.xlu0 %499
    %v502 = vsel %vm451, %v441, 0
    %v505 = vsel %vm451, %v500, 0
    %507 = vmatprep.subr.bf16.mxu0 0
    %508 = vmatpush1.bf16.xpose.msra.mxu0 %v505
    %509 = vmatprep.subr.bf16.mxu0 0
    %510 = vmatpush1.bf16.xpose.msra.mxu0 0
    %511 = vmatprep.subr.bf16.mxu0 0
    %512 = vmatpush1.bf16.xpose.msra.mxu0 0
    %513 = vmatprep.subr.bf16.mxu0 0
    %514 = vmatpush1.bf16.xpose.msra.mxu0 0
    %515 = vmatprep.subr.bf16.mxu0 0
    %516 = vmatpush1.bf16.xpose.msra.mxu0 0
    %517 = vmatprep.subr.bf16.mxu0 0
    %518 = vmatpush1.bf16.xpose.msra.mxu0 0
    %519 = vmatprep.subr.bf16.mxu0 0
    %520 = vmatpush1.bf16.xpose.msra.mxu0 0
    %521 = vmatprep.subr.bf16.mxu0 0
    %522 = vmatpush1.bf16.xpose.msra.mxu0 0
    %523 = vmatprep.subr.bf16.mxu0 0
    %524 = vmatpush1.bf16.xpose.msra.mxu0 0
    %525 = vmatprep.subr.bf16.mxu0 0
    %526 = vmatpush1.bf16.xpose.msra.mxu0 0
    %527 = vmatprep.subr.bf16.mxu0 0
    %528 = vmatpush1.bf16.xpose.msra.mxu0 0
    %529 = vmatprep.subr.bf16.mxu0 0
    %530 = vmatpush1.bf16.xpose.msra.mxu0 0
    %531 = vmatprep.subr.bf16.mxu0 0
    %532 = vmatpush1.bf16.xpose.msra.mxu0 0
    %533 = vmatprep.subr.bf16.mxu0 0
    %534 = vmatpush1.bf16.xpose.msra.mxu0 0
    %535 = vmatprep.subr.bf16.mxu0 0
    %536 = vmatpush1.bf16.xpose.msra.mxu0 0
    %537 = vmatprep.subr.bf16.mxu0 0
    %538 = vmatpush1.bf16.xpose.msra.mxu0 0
    %539 = vmatprep.mubr.bf16.mxu0 0
    %540 = vmatmul.mubr.bf16.gmra.mrb[0].mxu0 %v502
    %v541 = vpop.f32.mrb[0].mxu0
    %v542 = vadd.f32 0.0, %v541
    %v543 = vpop.f32.mrb[0].mxu0
    %v544 = vpop.f32.mrb[0].mxu0
    %v545 = vpop.f32.mrb[0].mxu0
    %546 = vdwg.mxu0
    %v547 = vsel %vm436, 1, 0
    %vm548 = vcmp.eq.s32.totalorder %v547, 1
    %v549 = vsel %vm548, %v493, -1e+30
    %v550 = vsel %vm548, %v542, -1e+30
    %v551 = vsel %vm451, %v549, -inf
    %552 = vmax.xlane.f32.xlu0 %v551
    %v553 = vpop.xlane.xlu0 %552
    %v554 = vsel %vm451, %v550, -inf
    %555 = vmax.xlane.f32.xlu0 %v554
    %v556 = vpop.xlane.xlu0 %555
    %v557 = vsub.f32 %v549, %v553
    %v558 = vsub.f32 %v550, %v556
    %v559 = vmul.f32 %v557, 1.442695
    %v560 = vpow.pop %v559
    %v561 = vmul.f32 %v558, 1.442695
    %v562 = vpow.pop %v561
    %v563 = vsel %vm451, %v560, 0.0
    %564 = vadd.xlane.f32.xlu0 %v563
    %v565 = vpop.xlane.xlu0 %564
    %v566 = vsel %vm451, %v562, 0.0
    %567 = vadd.xlane.f32.xlu0 %v566
    %v568 = vpop.xlane.xlu0 %567
    %v569 = vrcp.pop %v565
    %v570 = vrcp.pop %v568
    %v571 = vmul.f32 %v560, %v569
    %v572 = vmul.f32 %v562, %v570
    %v573 = vpack.c.bf16 %v571, %v571
    %v574 = vpack.c.bf16 %v572, %v572
    %v575 = vpack.c.b16 %v446, %v446
    %576 = vrot.lane.b32.xlu0 %v575, 64
    %v577 = vpop.permute.xlu0 %576
    %v579 = vsel %vm451, %v573, 0
    %vm581 = vcmask 1043456
    %v583 = vsel %vm581, %v577, 0
    %585 = vmatprep.subr.bf16.mxu0 0
    %586 = vmatpush1.bf16.msra.mxu0 %v583
    %587 = vmatprep.subr.bf16.mxu0 0
    %588 = vmatpush1.bf16.msra.mxu0 0
    %589 = vmatprep.subr.bf16.mxu0 0
    %590 = vmatpush1.bf16.msra.mxu0 0
    %591 = vmatprep.subr.bf16.mxu0 0
    %592 = vmatpush1.bf16.msra.mxu0 0
    %593 = vmatprep.subr.bf16.mxu0 0
    %594 = vmatpush1.bf16.msra.mxu0 0
    %595 = vmatprep.subr.bf16.mxu0 0
    %596 = vmatpush1.bf16.msra.mxu0 0
    %597 = vmatprep.subr.bf16.mxu0 0
    %598 = vmatpush1.bf16.msra.mxu0 0
    %599 = vmatprep.subr.bf16.mxu0 0
    %600 = vmatpush1.bf16.msra.mxu0 0
    %601 = vmatprep.subr.bf16.mxu0 0
    %602 = vmatpush1.bf16.msra.mxu0 0
    %603 = vmatprep.subr.bf16.mxu0 0
    %604 = vmatpush1.bf16.msra.mxu0 0
    %605 = vmatprep.subr.bf16.mxu0 0
    %606 = vmatpush1.bf16.msra.mxu0 0
    %607 = vmatprep.subr.bf16.mxu0 0
    %608 = vmatpush1.bf16.msra.mxu0 0
    %609 = vmatprep.subr.bf16.mxu0 0
    %610 = vmatpush1.bf16.msra.mxu0 0
    %611 = vmatprep.subr.bf16.mxu0 0
    %612 = vmatpush1.bf16.msra.mxu0 0
    %613 = vmatprep.subr.bf16.mxu0 0
    %614 = vmatpush1.bf16.msra.mxu0 0
    %615 = vmatprep.subr.bf16.mxu0 0
    %616 = vmatpush1.bf16.msra.mxu0 0
    %617 = vmatprep.mubr.bf16.mxu0 0
    %618 = vmatmul.mubr.bf16.gmra.mrb[0].mxu0 %v579
    %v619 = vpop.f32.mrb[0].mxu0
    %v620 = vadd.f32 0.0, %v619
    %v621 = vpop.f32.mrb[0].mxu0
    %v622 = vpop.f32.mrb[0].mxu0
    %v623 = vpop.f32.mrb[0].mxu0
    %624 = vdwg.mxu0
    %v625 = vpack.c.b16 %v447, %v447
    %626 = vrot.lane.b32.xlu0 %v625, 64
    %v627 = vpop.permute.xlu0 %626
    %v629 = vsel %vm451, %v574, 0
    %v632 = vsel %vm581, %v627, 0
    %634 = vmatprep.subr.bf16.mxu0 0
    %635 = vmatpush1.bf16.msra.mxu0 %v632
    %636 = vmatprep.subr.bf16.mxu0 0
    %637 = vmatpush1.bf16.msra.mxu0 0
    %638 = vmatprep.subr.bf16.mxu0 0
    %639 = vmatpush1.bf16.msra.mxu0 0
    %640 = vmatprep.subr.bf16.mxu0 0
    %641 = vmatpush1.bf16.msra.mxu0 0
    %642 = vmatprep.subr.bf16.mxu0 0
    %643 = vmatpush1.bf16.msra.mxu0 0
    %644 = vmatprep.subr.bf16.mxu0 0
    %645 = vmatpush1.bf16.msra.mxu0 0
    %646 = vmatprep.subr.bf16.mxu0 0
    %647 = vmatpush1.bf16.msra.mxu0 0
    %648 = vmatprep.subr.bf16.mxu0 0
    %649 = vmatpush1.bf16.msra.mxu0 0
    %650 = vmatprep.subr.bf16.mxu0 0
    %651 = vmatpush1.bf16.msra.mxu0 0
    %652 = vmatprep.subr.bf16.mxu0 0
    %653 = vmatpush1.bf16.msra.mxu0 0
    %654 = vmatprep.subr.bf16.mxu0 0
    %655 = vmatpush1.bf16.msra.mxu0 0
    %656 = vmatprep.subr.bf16.mxu0 0
    %657 = vmatpush1.bf16.msra.mxu0 0
    %658 = vmatprep.subr.bf16.mxu0 0
    %659 = vmatpush1.bf16.msra.mxu0 0
    %660 = vmatprep.subr.bf16.mxu0 0
    %661 = vmatpush1.bf16.msra.mxu0 0
    %662 = vmatprep.subr.bf16.mxu0 0
    %663 = vmatpush1.bf16.msra.mxu0 0
    %664 = vmatprep.subr.bf16.mxu0 0
    %665 = vmatpush1.bf16.msra.mxu0 0
    %666 = vmatprep.mubr.bf16.mxu0 0
    %667 = vmatmul.mubr.bf16.gmra.mrb[0].mxu0 %v629
    %v668 = vpop.f32.mrb[0].mxu0
    %v669 = vadd.f32 0.0, %v668
    %v670 = vpop.f32.mrb[0].mxu0
    %v671 = vpop.f32.mrb[0].mxu0
    %v672 = vpop.f32.mrb[0].mxu0
    %673 = vdwg.mxu0
    %v674 = vpack.c.bf16 %v669, %v620
    %675 = vst.msk [vmem:[#allocation2] sm:$0xff] %vm451, %v674
    %676 = vrot.lane.b32.xlu0 %v440, 120
    %v677 = vpop.permute.xlu0 %676
    %678 = vrot.lane.b32.xlu0 %v448, 88
    %v679 = vpop.permute.xlu0 %678
    %v681 = vsel %vm451, %v677, 0
    %v684 = vsel %vm451, %v679, 0
    %686 = vmatprep.subr.bf16.mxu0 0
    %687 = vmatpush1.bf16.xpose.msra.mxu0 %v684
    %688 = vmatprep.subr.bf16.mxu0 0
    %689 = vmatpush1.bf16.xpose.msra.mxu0 0
    %690 = vmatprep.subr.bf16.mxu0 0
    %691 = vmatpush1.bf16.xpose.msra.mxu0 0
    %692 = vmatprep.subr.bf16.mxu0 0
    %693 = vmatpush1.bf16.xpose.msra.mxu0 0
    %694 = vmatprep.subr.bf16.mxu0 0
    %695 = vmatpush1.bf16.xpose.msra.mxu0 0
    %696 = vmatprep.subr.bf16.mxu0 0
    %697 = vmatpush1.bf16.xpose.msra.mxu0 0
    %698 = vmatprep.subr.bf16.mxu0 0
    %699 = vmatpush1.bf16.xpose.msra.mxu0 0
    %700 = vmatprep.subr.bf16.mxu0 0
    %701 = vmatpush1.bf16.xpose.msra.mxu0 0
    %702 = vmatprep.subr.bf16.mxu0 0
    %703 = vmatpush1.bf16.xpose.msra.mxu0 0
    %704 = vmatprep.subr.bf16.mxu0 0
    %705 = vmatpush1.bf16.xpose.msra.mxu0 0
    %706 = vmatprep.subr.bf16.mxu0 0
    %707 = vmatpush1.bf16.xpose.msra.mxu0 0
    %708 = vmatprep.subr.bf16.mxu0 0
    %709 = vmatpush1.bf16.xpose.msra.mxu0 0
    %710 = vmatprep.subr.bf16.mxu0 0
    %711 = vmatpush1.bf16.xpose.msra.mxu0 0
    %712 = vmatprep.subr.bf16.mxu0 0
    %713 = vmatpush1.bf16.xpose.msra.mxu0 0
    %714 = vmatprep.subr.bf16.mxu0 0
    %715 = vmatpush1.bf16.xpose.msra.mxu0 0
    %716 = vmatprep.subr.bf16.mxu0 0
    %717 = vmatpush1.bf16.xpose.msra.mxu0 0
    %718 = vmatprep.mubr.bf16.mxu0 0
    %719 = vmatmul.mubr.bf16.gmra.mrb[0].mxu0 %v681
    %v720 = vpop.f32.mrb[0].mxu0
    %v721 = vadd.f32 0.0, %v720
    %v722 = vpop.f32.mrb[0].mxu0
    %v723 = vpop.f32.mrb[0].mxu0
    %v724 = vpop.f32.mrb[0].mxu0
    %725 = vdwg.mxu0
    %726 = vrot.lane.b32.xlu0 %v441, 120
    %v727 = vpop.permute.xlu0 %726
    %728 = vrot.lane.b32.xlu0 %v498, 88
    %v729 = vpop.permute.xlu0 %728
    %v731 = vsel %vm451, %v727, 0
    %v734 = vsel %vm451, %v729, 0
    %736 = vmatprep.subr.bf16.mxu0 0
    %737 = vmatpush1.bf16.xpose.msra.mxu0 %v734
    %738 = vmatprep.subr.bf16.mxu0 0
    %739 = vmatpush1.bf16.xpose.msra.mxu0 0
    %740 = vmatprep.subr.bf16.mxu0 0
    %741 = vmatpush1.bf16.xpose.msra.mxu0 0
    %742 = vmatprep.subr.bf16.mxu0 0
    %743 = vmatpush1.bf16.xpose.msra.mxu0 0
    %744 = vmatprep.subr.bf16.mxu0 0
    %745 = vmatpush1.bf16.xpose.msra.mxu0 0
    %746 = vmatprep.subr.bf16.mxu0 0
    %747 = vmatpush1.bf16.xpose.msra.mxu0 0
    %748 = vmatprep.subr.bf16.mxu0 0
    %749 = vmatpush1.bf16.xpose.msra.mxu0 0
    %750 = vmatprep.subr.bf16.mxu0 0
    %751 = vmatpush1.bf16.xpose.msra.mxu0 0
    %752 = vmatprep.subr.bf16.mxu0 0
    %753 = vmatpush1.bf16.xpose.msra.mxu0 0
    %754 = vmatprep.subr.bf16.mxu0 0
    %755 = vmatpush1.bf16.xpose.msra.mxu0 0
    %756 = vmatprep.subr.bf16.mxu0 0
    %757 = vmatpush1.bf16.xpose.msra.mxu0 0
    %758 = vmatprep.subr.bf16.mxu0 0
    %759 = vmatpush1.bf16.xpose.msra.mxu0 0
    %760 = vmatprep.subr.bf16.mxu0 0
    %761 = vmatpush1.bf16.xpose.msra.mxu0 0
    %762 = vmatprep.subr.bf16.mxu0 0
    %763 = vmatpush1.bf16.xpose.msra.mxu0 0
    %764 = vmatprep.subr.bf16.mxu0 0
    %765 = vmatpush1.bf16.xpose.msra.mxu0 0
    %766 = vmatprep.subr.bf16.mxu0 0
    %767 = vmatpush1.bf16.xpose.msra.mxu0 0
    %768 = vmatprep.mubr.bf16.mxu0 0
    %769 = vmatmul.mubr.bf16.gmra.mrb[0].mxu0 %v731
    %v770 = vpop.f32.mrb[0].mxu0
    %v771 = vadd.f32 0.0, %v770
    %v772 = vpop.f32.mrb[0].mxu0
    %v773 = vpop.f32.mrb[0].mxu0
    %v774 = vpop.f32.mrb[0].mxu0
    %775 = vdwg.mxu0
    %v776 = vsel %vm548, %v721, -1e+30
    %v777 = vsel %vm548, %v771, -1e+30
    %v778 = vsel %vm451, %v776, -inf
    %779 = vmax.xlane.f32.xlu0 %v778
    %v780 = vpop.xlane.xlu0 %779
    %v781 = vsel %vm451, %v777, -inf
    %782 = vmax.xlane.f32.xlu0 %v781
    %v783 = vpop.xlane.xlu0 %782
    %v784 = vsub.f32 %v776, %v780
    %v785 = vsub.f32 %v777, %v783
    %v786 = vmul.f32 %v784, 1.442695
    %v787 = vpow.pop %v786
    %v788 = vmul.f32 %v785, 1.442695
    %v789 = vpow.pop %v788
    %v790 = vsel %vm451, %v787, 0.0
    %791 = vadd.xlane.f32.xlu0 %v790
    %v792 = vpop.xlane.xlu0 %791
    %v793 = vsel %vm451, %v789, 0.0
    %794 = vadd.xlane.f32.xlu0 %v793
    %v795 = vpop.xlane.xlu0 %794
    %v796 = vrcp.pop %v792
    %v797 = vrcp.pop %v795
    %v798 = vmul.f32 %v787, %v796
    %v799 = vmul.f32 %v789, %v797
    %v800 = vpack.c.bf16 %v798, %v798
    %v801 = vpack.c.bf16 %v799, %v799
    %802 = vrot.lane.b32.xlu0 %v575, 56
    %v803 = vpop.permute.xlu0 %802
    %v805 = vsel %vm451, %v800, 0
    %v808 = vsel %vm581, %v803, 0
    %810 = vmatprep.subr.bf16.mxu0 0
    %811 = vmatpush1.bf16.msra.mxu0 %v808
    %812 = vmatprep.subr.bf16.mxu0 0
    %813 = vmatpush1.bf16.msra.mxu0 0
    %814 = vmatprep.subr.bf16.mxu0 0
    %815 = vmatpush1.bf16.msra.mxu0 0
    %816 = vmatprep.subr.bf16.mxu0 0
    %817 = vmatpush1.bf16.msra.mxu0 0
    %818 = vmatprep.subr.bf16.mxu0 0
    %819 = vmatpush1.bf16.msra.mxu0 0
    %820 = vmatprep.subr.bf16.mxu0 0
    %821 = vmatpush1.bf16.msra.mxu0 0
    %822 = vmatprep.subr.bf16.mxu0 0
    %823 = vmatpush1.bf16.msra.mxu0 0
    %824 = vmatprep.subr.bf16.mxu0 0
    %825 = vmatpush1.bf16.msra.mxu0 0
    %826 = vmatprep.subr.bf16.mxu0 0
    %827 = vmatpush1.bf16.msra.mxu0 0
    %828 = vmatprep.subr.bf16.mxu0 0
    %829 = vmatpush1.bf16.msra.mxu0 0
    %830 = vmatprep.subr.bf16.mxu0 0
    %831 = vmatpush1.bf16.msra.mxu0 0
    %832 = vmatprep.subr.bf16.mxu0 0
    %833 = vmatpush1.bf16.msra.mxu0 0
    %834 = vmatprep.subr.bf16.mxu0 0
    %835 = vmatpush1.bf16.msra.mxu0 0
    %836 = vmatprep.subr.bf16.mxu0 0
    %837 = vmatpush1.bf16.msra.mxu0 0
    %838 = vmatprep.subr.bf16.mxu0 0
    %839 = vmatpush1.bf16.msra.mxu0 0
    %840 = vmatprep.subr.bf16.mxu0 0
    %841 = vmatpush1.bf16.msra.mxu0 0
    %842 = vmatprep.mubr.bf16.mxu0 0
    %843 = vmatmul.mubr.bf16.gmra.mrb[0].mxu0 %v805
    %v844 = vpop.f32.mrb[0].mxu0
    %v845 = vadd.f32 0.0, %v844
    %v846 = vpop.f32.mrb[0].mxu0
    %v847 = vpop.f32.mrb[0].mxu0
    %v848 = vpop.f32.mrb[0].mxu0
    %849 = vdwg.mxu0
    %850 = vrot.lane.b32.xlu0 %v625, 56
    %v851 = vpop.permute.xlu0 %850
    %v853 = vsel %vm451, %v801, 0
    %v856 = vsel %vm581, %v851, 0
    %858 = vmatprep.subr.bf16.mxu0 0
    %859 = vmatpush1.bf16.msra.mxu0 %v856
    %860 = vmatprep.subr.bf16.mxu0 0
    %861 = vmatpush1.bf16.msra.mxu0 0
    %862 = vmatprep.subr.bf16.mxu0 0
    %863 = vmatpush1.bf16.msra.mxu0 0
    %864 = vmatprep.subr.bf16.mxu0 0
    %865 = vmatpush1.bf16.msra.mxu0 0
    %866 = vmatprep.subr.bf16.mxu0 0
    %867 = vmatpush1.bf16.msra.mxu0 0
    %868 = vmatprep.subr.bf16.mxu0 0
    %869 = vmatpush1.bf16.msra.mxu0 0
    %870 = vmatprep.subr.bf16.mxu0 0
    %871 = vmatpush1.bf16.msra.mxu0 0
    %872 = vmatprep.subr.bf16.mxu0 0
    %873 = vmatpush1.bf16.msra.mxu0 0
    %874 = vmatprep.subr.bf16.mxu0 0
    %875 = vmatpush1.bf16.msra.mxu0 0
    %876 = vmatprep.subr.bf16.mxu0 0
    %877 = vmatpush1.bf16.msra.mxu0 0
    %878 = vmatprep.subr.bf16.mxu0 0
    %879 = vmatpush1.bf16.msra.mxu0 0
    %880 = vmatprep.subr.bf16.mxu0 0
    %881 = vmatpush1.bf16.msra.mxu0 0
    %882 = vmatprep.subr.bf16.mxu0 0
    %883 = vmatpush1.bf16.msra.mxu0 0
    %884 = vmatprep.subr.bf16.mxu0 0
    %885 = vmatpush1.bf16.msra.mxu0 0
    %886 = vmatprep.subr.bf16.mxu0 0
    %887 = vmatpush1.bf16.msra.mxu0 0
    %888 = vmatprep.subr.bf16.mxu0 0
    %889 = vmatpush1.bf16.msra.mxu0 0
    %890 = vmatprep.mubr.bf16.mxu0 0
    %891 = vmatmul.mubr.bf16.gmra.mrb[0].mxu0 %v853
    %v892 = vpop.f32.mrb[0].mxu0
    %v893 = vadd.f32 0.0, %v892
    %v894 = vpop.f32.mrb[0].mxu0
    %v895 = vpop.f32.mrb[0].mxu0
    %v896 = vpop.f32.mrb[0].mxu0
    %897 = vdwg.mxu0
    %v898 = vpack.c.bf16 %v893, %v845
    %900 = vrot.lane.b32.xlu0 %v898, 8
    %v901 = vpop.permute.xlu0 %900
    %vm903 = vcmask 130112
    %904 = vst.msk [vmem:[#allocation2] sm:$0xff] %vm903, %v901
    %905 = vrot.lane.b32.xlu0 %v440, 112
    %v906 = vpop.permute.xlu0 %905
    %907 = vrot.lane.b32.xlu0 %v448, 80
    %v908 = vpop.permute.xlu0 %907
    %v910 = vsel %vm451, %v906, 0
    %v913 = vsel %vm451, %v908, 0
    %915 = vmatprep.subr.bf16.mxu0 0
    %916 = vmatpush1.bf16.xpose.msra.mxu0 %v913
    %917 = vmatprep.subr.bf16.mxu0 0
    %918 = vmatpush1.bf16.xpose.msra.mxu0 0
    %919 = vmatprep.subr.bf16.mxu0 0
    %920 = vmatpush1.bf16.xpose.msra.mxu0 0
    %921 = vmatprep.subr.bf16.mxu0 0
    %922 = vmatpush1.bf16.xpose.msra.mxu0 0
    %923 = vmatprep.subr.bf16.mxu0 0
    %924 = vmatpush1.bf16.xpose.msra.mxu0 0
    %925 = vmatprep.subr.bf16.mxu0 0
    %926 = vmatpush1.bf16.xpose.msra.mxu0 0
    %927 = vmatprep.subr.bf16.mxu0 0
    %928 = vmatpush1.bf16.xpose.msra.mxu0 0
    %929 = vmatprep.subr.bf16.mxu0 0
    %930 = vmatpush1.bf16.xpose.msra.mxu0 0
    %931 = vmatprep.subr.bf16.mxu0 0
    %932 = vmatpush1.bf16.xpose.msra.mxu0 0
    %933 = vmatprep.subr.bf16.mxu0 0
    %934 = vmatpush1.bf16.xpose.msra.mxu0 0
    %935 = vmatprep.subr.bf16.mxu0 0
    %936 = vmatpush1.bf16.xpose.msra.mxu0 0
    %937 = vmatprep.subr.bf16.mxu0 0
    %938 = vmatpush1.bf16.xpose.msra.mxu0 0
    %939 = vmatprep.subr.bf16.mxu0 0
    %940 = vmatpush1.bf16.xpose.msra.mxu0 0
    %941 = vmatprep.subr.bf16.mxu0 0
    %942 = vmatpush1.bf16.xpose.msra.mxu0 0
    %943 = vmatprep.subr.bf16.mxu0 0
    %944 = vmatpush1.bf16.xpose.msra.mxu0 0
    %945 = vmatprep.subr.bf16.mxu0 0
    %946 = vmatpush1.bf16.xpose.msra.mxu0 0
    %947 = vmatprep.mubr.bf16.mxu0 0
    %948 = vmatmul.mubr.bf16.gmra.mrb[0].mxu0 %v910
    %v949 = vpop.f32.mrb[0].mxu0
    %v950 = vadd.f32 0.0, %v949
    %v951 = vpop.f32.mrb[0].mxu0
    %v952 = vpop.f32.mrb[0].mxu0
    %v953 = vpop.f32.mrb[0].mxu0
    %954 = vdwg.mxu0
    %955 = vrot.lane.b32.xlu0 %v441, 112
    %v956 = vpop.permute.xlu0 %955
    %957 = vrot.lane.b32.xlu0 %v498, 80
    %v958 = vpop.permute.xlu0 %957
    %v960 = vsel %vm451, %v956, 0
    %v963 = vsel %vm451, %v958, 0
    %965 = vmatprep.subr.bf16.mxu0 0
    %966 = vmatpush1.bf16.xpose.msra.mxu0 %v963
    %967 = vmatprep.subr.bf16.mxu0 0
    %968 = vmatpush1.bf16.xpose.msra.mxu0 0
    %969 = vmatprep.subr.bf16.mxu0 0
    %970 = vmatpush1.bf16.xpose.msra.mxu0 0
    %971 = vmatprep.subr.bf16.mxu0 0
    %972 = vmatpush1.bf16.xpose.msra.mxu0 0
    %973 = vmatprep.subr.bf16.mxu0 0
    %974 = vmatpush1.bf16.xpose.msra.mxu0 0
    %975 = vmatprep.subr.bf16.mxu0 0
    %976 = vmatpush1.bf16.xpose.msra.mxu0 0
    %977 = vmatprep.subr.bf16.mxu0 0
    %978 = vmatpush1.bf16.xpose.msra.mxu0 0
    %979 = vmatprep.subr.bf16.mxu0 0
    %980 = vmatpush1.bf16.xpose.msra.mxu0 0
    %981 = vmatprep.subr.bf16.mxu0 0
    %982 = vmatpush1.bf16.xpose.msra.mxu0 0
    %983 = vmatprep.subr.bf16.mxu0 0
    %984 = vmatpush1.bf16.xpose.msra.mxu0 0
    %985 = vmatprep.subr.bf16.mxu0 0
    %986 = vmatpush1.bf16.xpose.msra.mxu0 0
    %987 = vmatprep.subr.bf16.mxu0 0
    %988 = vmatpush1.bf16.xpose.msra.mxu0 0
    %989 = vmatprep.subr.bf16.mxu0 0
    %990 = vmatpush1.bf16.xpose.msra.mxu0 0
    %991 = vmatprep.subr.bf16.mxu0 0
    %992 = vmatpush1.bf16.xpose.msra.mxu0 0
    %993 = vmatprep.subr.bf16.mxu0 0
    %994 = vmatpush1.bf16.xpose.msra.mxu0 0
    %995 = vmatprep.subr.bf16.mxu0 0
    %996 = vmatpush1.bf16.xpose.msra.mxu0 0
    %997 = vmatprep.mubr.bf16.mxu0 0
    %998 = vmatmul.mubr.bf16.gmra.mrb[0].mxu0 %v960
    %v999 = vpop.f32.mrb[0].mxu0
    %v1000 = vadd.f32 0.0, %v999
    %v1001 = vpop.f32.mrb[0].mxu0
    %v1002 = vpop.f32.mrb[0].mxu0
    %v1003 = vpop.f32.mrb[0].mxu0
    %1004 = vdwg.mxu0
    %v1005 = vsel %vm548, %v950, -1e+30
    %v1006 = vsel %vm548, %v1000, -1e+30
    %v1007 = vsel %vm451, %v1005, -inf
    %1008 = vmax.xlane.f32.xlu0 %v1007
    %v1009 = vpop.xlane.xlu0 %1008
    %v1010 = vsel %vm451, %v1006, -inf
    %1011 = vmax.xlane.f32.xlu0 %v1010
    %v1012 = vpop.xlane.xlu0 %1011
    %v1013 = vsub.f32 %v1005, %v1009
    %v1014 = vsub.f32 %v1006, %v1012
    %v1015 = vmul.f32 %v1013, 1.442695
    %v1016 = vpow.pop %v1015
    %v1017 = vmul.f32 %v1014, 1.442695
    %v1018 = vpow.pop %v1017
    %v1019 = vsel %vm451, %v1016, 0.0
    %1020 = vadd.xlane.f32.xlu0 %v1019
    %v1021 = vpop.xlane.xlu0 %1020
    %v1022 = vsel %vm451, %v1018, 0.0
    %1023 = vadd.xlane.f32.xlu0 %v1022
    %v1024 = vpop.xlane.xlu0 %1023
    %v1025 = vrcp.pop %v1021
    %v1026 = vrcp.pop %v1024
    %v1027 = vmul.f32 %v1016, %v1025
    %v1028 = vmul.f32 %v1018, %v1026
    %v1029 = vpack.c.bf16 %v1027, %v1027
    %v1030 = vpack.c.bf16 %v1028, %v1028
    %1031 = vrot.lane.b32.xlu0 %v575, 48
    %v1032 = vpop.permute.xlu0 %1031
    %v1034 = vsel %vm451, %v1029, 0
    %v1037 = vsel %vm581, %v1032, 0
    %1039 = vmatprep.subr.bf16.mxu0 0
    %1040 = vmatpush1.bf16.msra.mxu0 %v1037
    %1041 = vmatprep.subr.bf16.mxu0 0
    %1042 = vmatpush1.bf16.msra.mxu0 0
    %1043 = vmatprep.subr.bf16.mxu0 0
    %1044 = vmatpush1.bf16.msra.mxu0 0
    %1045 = vmatprep.subr.bf16.mxu0 0
    %1046 = vmatpush1.bf16.msra.mxu0 0
    %1047 = vmatprep.subr.bf16.mxu0 0
    %1048 = vmatpush1.bf16.msra.mxu0 0
    %1049 = vmatprep.subr.bf16.mxu0 0
    %1050 = vmatpush1.bf16.msra.mxu0 0
    %1051 = vmatprep.subr.bf16.mxu0 0
    %1052 = vmatpush1.bf16.msra.mxu0 0
    %1053 = vmatprep.subr.bf16.mxu0 0
    %1054 = vmatpush1.bf16.msra.mxu0 0
    %1055 = vmatprep.subr.bf16.mxu0 0
    %1056 = vmatpush1.bf16.msra.mxu0 0
    %1057 = vmatprep.subr.bf16.mxu0 0
    %1058 = vmatpush1.bf16.msra.mxu0 0
    %1059 = vmatprep.subr.bf16.mxu0 0
    %1060 = vmatpush1.bf16.msra.mxu0 0
    %1061 = vmatprep.subr.bf16.mxu0 0
    %1062 = vmatpush1.bf16.msra.mxu0 0
    %1063 = vmatprep.subr.bf16.mxu0 0
    %1064 = vmatpush1.bf16.msra.mxu0 0
    %1065 = vmatprep.subr.bf16.mxu0 0
    %1066 = vmatpush1.bf16.msra.mxu0 0
    %1067 = vmatprep.subr.bf16.mxu0 0
    %1068 = vmatpush1.bf16.msra.mxu0 0
    %1069 = vmatprep.subr.bf16.mxu0 0
    %1070 = vmatpush1.bf16.msra.mxu0 0
    %1071 = vmatprep.mubr.bf16.mxu0 0
    %1072 = vmatmul.mubr.bf16.gmra.mrb[0].mxu0 %v1034
    %v1073 = vpop.f32.mrb[0].mxu0
    %v1074 = vadd.f32 0.0, %v1073
    %v1075 = vpop.f32.mrb[0].mxu0
    %v1076 = vpop.f32.mrb[0].mxu0
    %v1077 = vpop.f32.mrb[0].mxu0
    %1078 = vdwg.mxu0
    %1079 = vrot.lane.b32.xlu0 %v625, 48
    %v1080 = vpop.permute.xlu0 %1079
    %v1082 = vsel %vm451, %v1030, 0
    %v1085 = vsel %vm581, %v1080, 0
    %1087 = vmatprep.subr.bf16.mxu0 0
    %1088 = vmatpush1.bf16.msra.mxu0 %v1085
    %1089 = vmatprep.subr.bf16.mxu0 0
    %1090 = vmatpush1.bf16.msra.mxu0 0
    %1091 = vmatprep.subr.bf16.mxu0 0
    %1092 = vmatpush1.bf16.msra.mxu0 0
    %1093 = vmatprep.subr.bf16.mxu0 0
    %1094 = vmatpush1.bf16.msra.mxu0 0
    %1095 = vmatprep.subr.bf16.mxu0 0
    %1096 = vmatpush1.bf16.msra.mxu0 0
    %1097 = vmatprep.subr.bf16.mxu0 0
    %1098 = vmatpush1.bf16.msra.mxu0 0
    %1099 = vmatprep.subr.bf16.mxu0 0
    %1100 = vmatpush1.bf16.msra.mxu0 0
    %1101 = vmatprep.subr.bf16.mxu0 0
    %1102 = vmatpush1.bf16.msra.mxu0 0
    %1103 = vmatprep.subr.bf16.mxu0 0
    %1104 = vmatpush1.bf16.msra.mxu0 0
    %1105 = vmatprep.subr.bf16.mxu0 0
    %1106 = vmatpush1.bf16.msra.mxu0 0
    %1107 = vmatprep.subr.bf16.mxu0 0
    %1108 = vmatpush1.bf16.msra.mxu0 0
    %1109 = vmatprep.subr.bf16.mxu0 0
    %1110 = vmatpush1.bf16.msra.mxu0 0
    %1111 = vmatprep.subr.bf16.mxu0 0
    %1112 = vmatpush1.bf16.msra.mxu0 0
    %1113 = vmatprep.subr.bf16.mxu0 0
    %1114 = vmatpush1.bf16.msra.mxu0 0
    %1115 = vmatprep.subr.bf16.mxu0 0
    %1116 = vmatpush1.bf16.msra.mxu0 0
    %1117 = vmatprep.subr.bf16.mxu0 0
    %1118 = vmatpush1.bf16.msra.mxu0 0
    %1119 = vmatprep.mubr.bf16.mxu0 0
    %1120 = vmatmul.mubr.bf16.gmra.mrb[0].mxu0 %v1082
    %v1121 = vpop.f32.mrb[0].mxu0
    %v1122 = vadd.f32 0.0, %v1121
    %v1123 = vpop.f32.mrb[0].mxu0
    %v1124 = vpop.f32.mrb[0].mxu0
    %v1125 = vpop.f32.mrb[0].mxu0
    %1126 = vdwg.mxu0
    %v1127 = vpack.c.bf16 %v1122, %v1074
    %1129 = vrot.lane.b32.xlu0 %v1127, 16
    %v1130 = vpop.permute.xlu0 %1129
    %vm1132 = vcmask 195712
    %1133 = vst.msk [vmem:[#allocation2] sm:$0xff] %vm1132, %v1130
    %1134 = vrot.lane.b32.xlu0 %v440, 104
    %v1135 = vpop.permute.xlu0 %1134
    %1136 = vrot.lane.b32.xlu0 %v448, 72
    %v1137 = vpop.permute.xlu0 %1136
    %v1139 = vsel %vm451, %v1135, 0
    %v1142 = vsel %vm451, %v1137, 0
    %1144 = vmatprep.subr.bf16.mxu0 0
    %1145 = vmatpush1.bf16.xpose.msra.mxu0 %v1142
    %1146 = vmatprep.subr.bf16.mxu0 0
    %1147 = vmatpush1.bf16.xpose.msra.mxu0 0
    %1148 = vmatprep.subr.bf16.mxu0 0
    %1149 = vmatpush1.bf16.xpose.msra.mxu0 0
    %1150 = vmatprep.subr.bf16.mxu0 0
    %1151 = vmatpush1.bf16.xpose.msra.mxu0 0
    %1152 = vmatprep.subr.bf16.mxu0 0
    %1153 = vmatpush1.bf16.xpose.msra.mxu0 0
    %1154 = vmatprep.subr.bf16.mxu0 0
    %1155 = vmatpush1.bf16.xpose.msra.mxu0 0
    %1156 = vmatprep.subr.bf16.mxu0 0
    %1157 = vmatpush1.bf16.xpose.msra.mxu0 0
    %1158 = vmatprep.subr.bf16.mxu0 0
    %1159 = vmatpush1.bf16.xpose.msra.mxu0 0
    %1160 = vmatprep.subr.bf16.mxu0 0
    %1161 = vmatpush1.bf16.xpose.msra.mxu0 0
    %1162 = vmatprep.subr.bf16.mxu0 0
    %1163 = vmatpush1.bf16.xpose.msra.mxu0 0
    %1164 = vmatprep.subr.bf16.mxu0 0
    %1165 = vmatpush1.bf16.xpose.msra.mxu0 0
    %1166 = vmatprep.subr.bf16.mxu0 0
    %1167 = vmatpush1.bf16.xpose.msra.mxu0 0
    %1168 = vmatprep.subr.bf16.mxu0 0
    %1169 = vmatpush1.bf16.xpose.msra.mxu0 0
    %1170 = vmatprep.subr.bf16.mxu0 0
    %1171 = vmatpush1.bf16.xpose.msra.mxu0 0
    %1172 = vmatprep.subr.bf16.mxu0 0
    %1173 = vmatpush1.bf16.xpose.msra.mxu0 0
    %1174 = vmatprep.subr.bf16.mxu0 0
    %1175 = vmatpush1.bf16.xpose.msra.mxu0 0
    %1176 = vmatprep.mubr.bf16.mxu0 0
    %1177 = vmatmul.mubr.bf16.gmra.mrb[0].mxu0 %v1139
    %v1178 = vpop.f32.mrb[0].mxu0
    %v1179 = vadd.f32 0.0, %v1178
    %v1180 = vpop.f32.mrb[0].mxu0
    %v1181 = vpop.f32.mrb[0].mxu0
    %v1182 = vpop.f32.mrb[0].mxu0
    %1183 = vdwg.mxu0
    %1184 = vrot.lane.b32.xlu0 %v441, 104
    %v1185 = vpop.permute.xlu0 %1184
    %1186 = vrot.lane.b32.xlu0 %v498, 72
    %v1187 = vpop.permute.xlu0 %1186
    %v1189 = vsel %vm451, %v1185, 0
    %v1192 = vsel %vm451, %v1187, 0
    %1194 = vmatprep.subr.bf16.mxu0 0
    %1195 = vmatpush1.bf16.xpose.msra.mxu0 %v1192
    %1196 = vmatprep.subr.bf16.mxu0 0
    %1197 = vmatpush1.bf16.xpose.msra.mxu0 0
    %1198 = vmatprep.subr.bf16.mxu0 0
    %1199 = vmatpush1.bf16.xpose.msra.mxu0 0
    %1200 = vmatprep.subr.bf16.mxu0 0
    %1201 = vmatpush1.bf16.xpose.msra.mxu0 0
    %1202 = vmatprep.subr.bf16.mxu0 0
    %1203 = vmatpush1.bf16.xpose.msra.mxu0 0
    %1204 = vmatprep.subr.bf16.mxu0 0
    %1205 = vmatpush1.bf16.xpose.msra.mxu0 0
    %1206 = vmatprep.subr.bf16.mxu0 0
    %1207 = vmatpush1.bf16.xpose.msra.mxu0 0
    %1208 = vmatprep.subr.bf16.mxu0 0
    %1209 = vmatpush1.bf16.xpose.msra.mxu0 0
    %1210 = vmatprep.subr.bf16.mxu0 0
    %1211 = vmatpush1.bf16.xpose.msra.mxu0 0
    %1212 = vmatprep.subr.bf16.mxu0 0
    %1213 = vmatpush1.bf16.xpose.msra.mxu0 0
    %1214 = vmatprep.subr.bf16.mxu0 0
    %1215 = vmatpush1.bf16.xpose.msra.mxu0 0
    %1216 = vmatprep.subr.bf16.mxu0 0
    %1217 = vmatpush1.bf16.xpose.msra.mxu0 0
    %1218 = vmatprep.subr.bf16.mxu0 0
    %1219 = vmatpush1.bf16.xpose.msra.mxu0 0
    %1220 = vmatprep.subr.bf16.mxu0 0
    %1221 = vmatpush1.bf16.xpose.msra.mxu0 0
    %1222 = vmatprep.subr.bf16.mxu0 0
    %1223 = vmatpush1.bf16.xpose.msra.mxu0 0
    %1224 = vmatprep.subr.bf16.mxu0 0
    %1225 = vmatpush1.bf16.xpose.msra.mxu0 0
    %1226 = vmatprep.mubr.bf16.mxu0 0
    %1227 = vmatmul.mubr.bf16.gmra.mrb[0].mxu0 %v1189
    %v1228 = vpop.f32.mrb[0].mxu0
    %v1229 = vadd.f32 0.0, %v1228
    %v1230 = vpop.f32.mrb[0].mxu0
    %v1231 = vpop.f32.mrb[0].mxu0
    %v1232 = vpop.f32.mrb[0].mxu0
    %1233 = vdwg.mxu0
    %v1234 = vsel %vm548, %v1179, -1e+30
    %v1235 = vsel %vm548, %v1229, -1e+30
    %v1236 = vsel %vm451, %v1234, -inf
    %1237 = vmax.xlane.f32.xlu0 %v1236
    %v1238 = vpop.xlane.xlu0 %1237
    %v1239 = vsel %vm451, %v1235, -inf
    %1240 = vmax.xlane.f32.xlu0 %v1239
    %v1241 = vpop.xlane.xlu0 %1240
    %v1242 = vsub.f32 %v1234, %v1238
    %v1243 = vsub.f32 %v1235, %v1241
    %v1244 = vmul.f32 %v1242, 1.442695
    %v1245 = vpow.pop %v1244
    %v1246 = vmul.f32 %v1243, 1.442695
    %v1247 = vpow.pop %v1246
    %v1248 = vsel %vm451, %v1245, 0.0
    %1249 = vadd.xlane.f32.xlu0 %v1248
    %v1250 = vpop.xlane.xlu0 %1249
    %v1251 = vsel %vm451, %v1247, 0.0
    %1252 = vadd.xlane.f32.xlu0 %v1251
    %v1253 = vpop.xlane.xlu0 %1252
    %v1254 = vrcp.pop %v1250
    %v1255 = vrcp.pop %v1253
    %v1256 = vmul.f32 %v1245, %v1254
    %v1257 = vmul.f32 %v1247, %v1255
    %v1258 = vpack.c.bf16 %v1256, %v1256
    %v1259 = vpack.c.bf16 %v1257, %v1257
    %1260 = vrot.lane.b32.xlu0 %v575, 40
    %v1261 = vpop.permute.xlu0 %1260
    %v1263 = vsel %vm451, %v1258, 0
    %v1266 = vsel %vm581, %v1261, 0
    %1268 = vmatprep.subr.bf16.mxu0 0
    %1269 = vmatpush1.bf16.msra.mxu0 %v1266
    %1270 = vmatprep.subr.bf16.mxu0 0
    %1271 = vmatpush1.bf16.msra.mxu0 0
    %1272 = vmatprep.subr.bf16.mxu0 0
    %1273 = vmatpush1.bf16.msra.mxu0 0
    %1274 = vmatprep.subr.bf16.mxu0 0
    %1275 = vmatpush1.bf16.msra.mxu0 0
    %1276 = vmatprep.subr.bf16.mxu0 0
    %1277 = vmatpush1.bf16.msra.mxu0 0
    %1278 = vmatprep.subr.bf16.mxu0 0
    %1279 = vmatpush1.bf16.msra.mxu0 0
    %1280 = vmatprep.subr.bf16.mxu0 0
    %1281 = vmatpush1.bf16.msra.mxu0 0
    %1282 = vmatprep.subr.bf16.mxu0 0
    %1283 = vmatpush1.bf16.msra.mxu0 0
    %1284 = vmatprep.subr.bf16.mxu0 0
    %1285 = vmatpush1.bf16.msra.mxu0 0
    %1286 = vmatprep.subr.bf16.mxu0 0
    %1287 = vmatpush1.bf16.msra.mxu0 0
    %1288 = vmatprep.subr.bf16.mxu0 0
    %1289 = vmatpush1.bf16.msra.mxu0 0
    %1290 = vmatprep.subr.bf16.mxu0 0
    %1291 = vmatpush1.bf16.msra.mxu0 0
    %1292 = vmatprep.subr.bf16.mxu0 0
    %1293 = vmatpush1.bf16.msra.mxu0 0
    %1294 = vmatprep.subr.bf16.mxu0 0
    %1295 = vmatpush1.bf16.msra.mxu0 0
    %1296 = vmatprep.subr.bf16.mxu0 0
    %1297 = vmatpush1.bf16.msra.mxu0 0
    %1298 = vmatprep.subr.bf16.mxu0 0
    %1299 = vmatpush1.bf16.msra.mxu0 0
    %1300 = vmatprep.mubr.bf16.mxu0 0
    %1301 = vmatmul.mubr.bf16.gmra.mrb[0].mxu0 %v1263
    %v1302 = vpop.f32.mrb[0].mxu0
    %v1303 = vadd.f32 0.0, %v1302
    %v1304 = vpop.f32.mrb[0].mxu0
    %v1305 = vpop.f32.mrb[0].mxu0
    %v1306 = vpop.f32.mrb[0].mxu0
    %1307 = vdwg.mxu0
    %1308 = vrot.lane.b32.xlu0 %v625, 40
    %v1309 = vpop.permute.xlu0 %1308
    %v1311 = vsel %vm451, %v1259, 0
    %v1314 = vsel %vm581, %v1309, 0
    %1316 = vmatprep.subr.bf16.mxu0 0
    %1317 = vmatpush1.bf16.msra.mxu0 %v1314
    %1318 = vmatprep.subr.bf16.mxu0 0
    %1319 = vmatpush1.bf16.msra.mxu0 0
    %1320 = vmatprep.subr.bf16.mxu0 0
    %1321 = vmatpush1.bf16.msra.mxu0 0
    %1322 = vmatprep.subr.bf16.mxu0 0
    %1323 = vmatpush1.bf16.msra.mxu0 0
    %1324 = vmatprep.subr.bf16.mxu0 0
    %1325 = vmatpush1.bf16.msra.mxu0 0
    %1326 = vmatprep.subr.bf16.mxu0 0
    %1327 = vmatpush1.bf16.msra.mxu0 0
    %1328 = vmatprep.subr.bf16.mxu0 0
    %1329 = vmatpush1.bf16.msra.mxu0 0
    %1330 = vmatprep.subr.bf16.mxu0 0
    %1331 = vmatpush1.bf16.msra.mxu0 0
    %1332 = vmatprep.subr.bf16.mxu0 0
    %1333 = vmatpush1.bf16.msra.mxu0 0
    %1334 = vmatprep.subr.bf16.mxu0 0
    %1335 = vmatpush1.bf16.msra.mxu0 0
    %1336 = vmatprep.subr.bf16.mxu0 0
    %1337 = vmatpush1.bf16.msra.mxu0 0
    %1338 = vmatprep.subr.bf16.mxu0 0
    %1339 = vmatpush1.bf16.msra.mxu0 0
    %1340 = vmatprep.subr.bf16.mxu0 0
    %1341 = vmatpush1.bf16.msra.mxu0 0
    %1342 = vmatprep.subr.bf16.mxu0 0
    %1343 = vmatpush1.bf16.msra.mxu0 0
    %1344 = vmatprep.subr.bf16.mxu0 0
    %1345 = vmatpush1.bf16.msra.mxu0 0
    %1346 = vmatprep.subr.bf16.mxu0 0
    %1347 = vmatpush1.bf16.msra.mxu0 0
    %1348 = vmatprep.mubr.bf16.mxu0 0
    %1349 = vmatmul.mubr.bf16.gmra.mrb[0].mxu0 %v1311
    %v1350 = vpop.f32.mrb[0].mxu0
    %v1351 = vadd.f32 0.0, %v1350
    %v1352 = vpop.f32.mrb[0].mxu0
    %v1353 = vpop.f32.mrb[0].mxu0
    %v1354 = vpop.f32.mrb[0].mxu0
    %1355 = vdwg.mxu0
    %v1356 = vpack.c.bf16 %v1351, %v1303
    %1358 = vrot.lane.b32.xlu0 %v1356, 24
    %v1359 = vpop.permute.xlu0 %1358
    %vm1361 = vcmask 261312
    %1362 = vst.msk [vmem:[#allocation2] sm:$0xff] %vm1361, %v1359
    %v1363 = vld [vmem:[#allocation2] sm:$0xff]
    %v1364 = vld [vmem:[%s9] sm:$0xf]
    %v1365 = vld [vmem:[%s9 + $0x4] sm:$0xf]
    %v1366 = vld [vmem:[%s9 + $0x8] sm:$0xf]
    %v1367 = vld [vmem:[%s9 + $0xc] sm:$0xf]
    %v1368 = vld [vmem:[#allocation12] sm:$0x1]
    %v1369 = vunpack.c.l.bf16 %v1368
    %v1370 = vlaneseq
    %v1371 = vshrl.u32 %v1370, 7
    %v1372 = vsub.s32 0, %v1371
    %v1373 = vrot.slane %v1369, %v1372
    %v1378 = vunpack.c.l.b16 %v1364
    %v1379 = vunpack.c.l.b16 %v1365
    %v1380 = vunpack.c.l.b16 %v1366
    %v1381 = vunpack.c.l.b16 %v1367
    %v1382 = vpack.c.b16 %v1379, %v1378
    %v1383 = vpack.c.b16 %v1381, %v1380
    %v1387 = vsel %vm184, %v1363, 0
    %1389 = vmatprep.subr.bf16.mxu0 0
    %1390 = vmatpush1.bf16.msra.mxu0 %v1382
    %1391 = vmatprep.subr.bf16.mxu0 0
    %1392 = vmatpush1.bf16.msra.mxu0 %v1383
    %1393 = vmatprep.subr.bf16.mxu0 0
    %1394 = vmatpush1.bf16.msra.mxu0 0
    %1395 = vmatprep.subr.bf16.mxu0 0
    %1396 = vmatpush1.bf16.msra.mxu0 0
    %1397 = vmatprep.subr.bf16.mxu0 0
    %1398 = vmatpush1.bf16.msra.mxu0 0
    %1399 = vmatprep.subr.bf16.mxu0 0
    %1400 = vmatpush1.bf16.msra.mxu0 0
    %1401 = vmatprep.subr.bf16.mxu0 0
    %1402 = vmatpush1.bf16.msra.mxu0 0
    %1403 = vmatprep.subr.bf16.mxu0 0
    %1404 = vmatpush1.bf16.msra.mxu0 0
    %1405 = vmatprep.subr.bf16.mxu0 0
    %1406 = vmatpush1.bf16.msra.mxu0 0
    %1407 = vmatprep.subr.bf16.mxu0 0
    %1408 = vmatpush1.bf16.msra.mxu0 0
    %1409 = vmatprep.subr.bf16.mxu0 0
    %1410 = vmatpush1.bf16.msra.mxu0 0
    %1411 = vmatprep.subr.bf16.mxu0 0
    %1412 = vmatpush1.bf16.msra.mxu0 0
    %1413 = vmatprep.subr.bf16.mxu0 0
    %1414 = vmatpush1.bf16.msra.mxu0 0
    %1415 = vmatprep.subr.bf16.mxu0 0
    %1416 = vmatpush1.bf16.msra.mxu0 0
    %1417 = vmatprep.subr.bf16.mxu0 0
    %1418 = vmatpush1.bf16.msra.mxu0 0
    %1419 = vmatprep.subr.bf16.mxu0 0
    %1420 = vmatpush1.bf16.msra.mxu0 0
    %1421 = vmatprep.mubr.bf16.mxu0 0
    %1422 = vmatmul.mubr.bf16.gmra.mrb[0].mxu0 %v1387
    %v1423 = vpop.f32.mrb[0].mxu0
    %v1424 = vadd.f32 %v1373, %v1423
    %v1425 = vpop.f32.mrb[0].mxu0
    %v1426 = vpop.f32.mrb[0].mxu0
    %v1427 = vadd.f32 %v1373, %v1426
    %v1428 = vpop.f32.mrb[0].mxu0
    %1429 = vdwg.mxu0
    %v1430 = vunpack.c.l.bf16 %v151
    %v1431 = vunpack.c.l.bf16 %v152
    %v1432 = vadd.f32 %v1430, %v1424
    %v1433 = vadd.f32 %v1431, %v1427
    %v1434 = vsel %vm184, %v1432, 0.0
    %1435 = vadd.xlane.f32.xlu0 %v1434
    %v1436 = vpop.xlane.xlu0 %1435
    %v1437 = vsel %vm184, %v1433, 0.0
    %1438 = vadd.xlane.f32.xlu0 %v1437
    %v1439 = vpop.xlane.xlu0 %1438
    %v1440 = vrcp.pop 32.0
    %v1441 = vmul.f32 %v1436, %v1440
    %v1442 = vmul.f32 %v1439, %v1440
    %v1443 = vsub.f32 %v1432, %v1441
    %v1444 = vsub.f32 %v1433, %v1442
    %v1445 = vmul.f32 %v1443, %v1443
    %v1446 = vmul.f32 %v1444, %v1444
    %v1447 = vsel %vm184, %v1445, 0.0
    %1448 = vadd.xlane.f32.xlu0 %v1447
    %v1449 = vpop.xlane.xlu0 %1448
    %v1450 = vsel %vm184, %v1446, 0.0
    %1451 = vadd.xlane.f32.xlu0 %v1450
    %v1452 = vpop.xlane.xlu0 %1451
    %v1453 = vmul.f32 %v1449, %v1440
    %v1454 = vmul.f32 %v1452, %v1440
    %v1455 = vadd.f32 %v1453, 1e-05
    %v1456 = vadd.f32 %v1454, 1e-05
    %v1457 = vrsqrt.pop %v1455
    %v1458 = vrsqrt.pop %v1456
    %v1459 = vmul.f32 %v1443, %v1457
    %v1460 = vmul.f32 %v1444, %v1458
    %v1461 = vld [vmem:[#allocation14] sm:$0x1]
    %v1462 = vunpack.c.l.bf16 %v1461
    %v1463 = vlaneseq
    %v1464 = vshrl.u32 %v1463, 7
    %v1465 = vsub.s32 0, %v1464
    %v1466 = vrot.slane %v1462, %v1465
    %v1467 = vmul.f32 %v1459, %v1466
    %v1468 = vmul.f32 %v1460, %v1466
    %v1469 = vld [vmem:[#allocation15] sm:$0x1]
    %v1470 = vunpack.c.l.bf16 %v1469
    %v1471 = vlaneseq
    %v1472 = vshrl.u32 %v1471, 7
    %v1473 = vsub.s32 0, %v1472
    %v1474 = vrot.slane %v1470, %v1473
    %v1475 = vadd.f32 %v1467, %v1474
    %v1476 = vadd.f32 %v1468, %v1474
    %v1477 = vpack.c.bf16 %v1476, %v1475
    %v1478 = vld [vmem:[%s13] sm:$0xf]
    %v1479 = vld [vmem:[%s13 + $0x4] sm:$0xf]
    %v1480 = vld [vmem:[%s13 + $0x8] sm:$0xf]
    %v1481 = vld [vmem:[%s13 + $0xc] sm:$0xf]
    %v1486 = vunpack.c.l.b16 %v1478
    %v1487 = vunpack.c.l.b16 %v1479
    %v1488 = vunpack.c.l.b16 %v1480
    %v1489 = vunpack.c.l.b16 %v1481
    %v1490 = vpack.c.b16 %v1487, %v1486
    %v1491 = vpack.c.b16 %v1489, %v1488
    %v1495 = vsel %vm184, %v1477, 0
    %1497 = vmatprep.subr.bf16.mxu0 0
    %1498 = vmatpush1.bf16.msra.mxu0 %v1490
    %1499 = vmatprep.subr.bf16.mxu0 0
    %1500 = vmatpush1.bf16.msra.mxu0 %v1491
    %1501 = vmatprep.subr.bf16.mxu0 0
    %1502 = vmatpush1.bf16.msra.mxu0 0
    %1503 = vmatprep.subr.bf16.mxu0 0
    %1504 = vmatpush1.bf16.msra.mxu0 0
    %1505 = vmatprep.subr.bf16.mxu0 0
    %1506 = vmatpush1.bf16.msra.mxu0 0
    %1507 = vmatprep.subr.bf16.mxu0 0
    %1508 = vmatpush1.bf16.msra.mxu0 0
    %1509 = vmatprep.subr.bf16.mxu0 0
    %1510 = vmatpush1.bf16.msra.mxu0 0
    %1511 = vmatprep.subr.bf16.mxu0 0
    %1512 = vmatpush1.bf16.msra.mxu0 0
    %1513 = vmatprep.subr.bf16.mxu0 0
    %1514 = vmatpush1.bf16.msra.mxu0 0
    %1515 = vmatprep.subr.bf16.mxu0 0
    %1516 = vmatpush1.bf16.msra.mxu0 0
    %1517 = vmatprep.subr.bf16.mxu0 0
    %1518 = vmatpush1.bf16.msra.mxu0 0
    %1519 = vmatprep.subr.bf16.mxu0 0
    %1520 = vmatpush1.bf16.msra.mxu0 0
    %1521 = vmatprep.subr.bf16.mxu0 0
    %1522 = vmatpush1.bf16.msra.mxu0 0
    %1523 = vmatprep.subr.bf16.mxu0 0
    %1524 = vmatpush1.bf16.msra.mxu0 0
    %1525 = vmatprep.subr.bf16.mxu0 0
    %1526 = vmatpush1.bf16.msra.mxu0 0
    %1527 = vmatprep.subr.bf16.mxu0 0
    %1528 = vmatpush1.bf16.msra.mxu0 0
    %1529 = vmatprep.mubr.bf16.mxu0 0
    %1530 = vmatmul.mubr.bf16.gmra.mrb[0].mxu0 %v1495
    %v1531 = vpop.f32.mrb[0].mxu0
    %v1532 = vadd.f32 0.0, %v1531
    %v1533 = vpop.f32.mrb[0].mxu0
    %v1534 = vpop.f32.mrb[0].mxu0
    %v1535 = vadd.f32 0.0, %v1534
    %v1536 = vpop.f32.mrb[0].mxu0
    %1537 = vdwg.mxu0
    %v1538 = vmul.f32 %v1532, %v1532
    %v1539 = vmul.f32 %v1535, %v1535
    %v1540 = vmul.f32 %v1532, %v1538
    %v1541 = vmul.f32 %v1535, %v1539
    %v1542 = vmul.f32 %v1540, 0.044715
    %v1543 = vmul.f32 %v1541, 0.044715
    %v1544 = vadd.f32 %v1532, %v1542
    %v1545 = vadd.f32 %v1535, %v1543
    %v1546 = vmul.f32 %v1544, 0.7978846
    %v1547 = vmul.f32 %v1545, 0.7978846
    %v1548 = vtanh.pop %v1546
    %v1549 = vtanh.pop %v1547
    %v1550 = vadd.f32 %v1548, 1.0
    %v1551 = vadd.f32 %v1549, 1.0
    %v1552 = vmul.f32 %v1550, 0.5
    %v1553 = vmul.f32 %v1551, 0.5
    %v1554 = vmul.f32 %v1532, %v1552
    %v1555 = vmul.f32 %v1535, %v1553
    %v1556 = vpack.c.bf16 %v1555, %v1554
    %v1557 = vld [vmem:[%s14] sm:$0xf]
    %v1558 = vld [vmem:[%s14 + $0x4] sm:$0xf]
    %v1559 = vld [vmem:[%s14 + $0x8] sm:$0xf]
    %v1560 = vld [vmem:[%s14 + $0xc] sm:$0xf]
    %v1561 = vld [vmem:[%s14 + $0x10] sm:$0xf]
    %v1562 = vld [vmem:[%s14 + $0x14] sm:$0xf]
    %v1563 = vld [vmem:[%s14 + $0x18] sm:$0xf]
    %v1564 = vld [vmem:[%s14 + $0x1c] sm:$0xf]
    %v1573 = vunpack.c.l.b16 %v1557
    %v1574 = vunpack.c.l.b16 %v1558
    %v1575 = vunpack.c.l.b16 %v1559
    %v1576 = vunpack.c.l.b16 %v1560
    %v1577 = vunpack.c.l.b16 %v1561
    %v1578 = vunpack.c.l.b16 %v1562
    %v1579 = vunpack.c.l.b16 %v1563
    %v1580 = vunpack.c.l.b16 %v1564
    %v1581 = vpack.c.b16 %v1574, %v1573
    %v1582 = vpack.c.b16 %v1576, %v1575
    %v1583 = vpack.c.b16 %v1578, %v1577
    %v1584 = vpack.c.b16 %v1580, %v1579
    %vm1589 = vcmask 523264
    %v1591 = vsel %vm1589, %v1556, 0
    %1593 = vmatprep.subr.bf16.mxu0 0
    %1594 = vmatpush1.bf16.msra.mxu0 %v1581
    %1595 = vmatprep.subr.bf16.mxu0 0
    %1596 = vmatpush1.bf16.msra.mxu0 %v1582
    %1597 = vmatprep.subr.bf16.mxu0 0
    %1598 = vmatpush1.bf16.msra.mxu0 %v1583
    %1599 = vmatprep.subr.bf16.mxu0 0
    %1600 = vmatpush1.bf16.msra.mxu0 %v1584
    %1601 = vmatprep.subr.bf16.mxu0 0
    %1602 = vmatpush1.bf16.msra.mxu0 0
    %1603 = vmatprep.subr.bf16.mxu0 0
    %1604 = vmatpush1.bf16.msra.mxu0 0
    %1605 = vmatprep.subr.bf16.mxu0 0
    %1606 = vmatpush1.bf16.msra.mxu0 0
    %1607 = vmatprep.subr.bf16.mxu0 0
    %1608 = vmatpush1.bf16.msra.mxu0 0
    %1609 = vmatprep.subr.bf16.mxu0 0
    %1610 = vmatpush1.bf16.msra.mxu0 0
    %1611 = vmatprep.subr.bf16.mxu0 0
    %1612 = vmatpush1.bf16.msra.mxu0 0
    %1613 = vmatprep.subr.bf16.mxu0 0
    %1614 = vmatpush1.bf16.msra.mxu0 0
    %1615 = vmatprep.subr.bf16.mxu0 0
    %1616 = vmatpush1.bf16.msra.mxu0 0
    %1617 = vmatprep.subr.bf16.mxu0 0
    %1618 = vmatpush1.bf16.msra.mxu0 0
    %1619 = vmatprep.subr.bf16.mxu0 0
    %1620 = vmatpush1.bf16.msra.mxu0 0
    %1621 = vmatprep.subr.bf16.mxu0 0
    %1622 = vmatpush1.bf16.msra.mxu0 0
    %1623 = vmatprep.subr.bf16.mxu0 0
    %1624 = vmatpush1.bf16.msra.mxu0 0
    %1625 = vmatprep.mubr.bf16.mxu0 0
    %1626 = vmatmul.mubr.bf16.gmra.mrb[0].mxu0 %v1591
    %v1627 = vpop.f32.mrb[0].mxu0
    %v1628 = vadd.f32 0.0, %v1627
    %v1629 = vpop.f32.mrb[0].mxu0
    %v1630 = vpop.f32.mrb[0].mxu0
    %v1631 = vadd.f32 0.0, %v1630
    %v1632 = vpop.f32.mrb[0].mxu0
    %1633 = vdwg.mxu0
    %v1634 = vadd.f32 %v1432, %v1628
    %v1635 = vadd.f32 %v1433, %v1631
    %v1636 = vpack.c.bf16 %v1635, %v1634
    %v1638 = vunpack.c.l.b16 %v1636
    %v1639 = vunpack.c.h.b16 %v1636
    %v1640 = vpack.c.b16 %v1638, %v1638
    %v1641 = vpack.c.b16 %v1639, %v1639
    %vm1644 = vcmask 257024
    %1645 = vst.msk [vmem:[#allocation17] sm:$0xf] %vm1644, %v1640
    %1646 = vst.msk [vmem:[#allocation17 + $0x4] sm:$0xf] %vm1644, %v1641
    // Predicated region
    $region94: #{tpu_custom_call.1} parent=1 // pred_check
      _
    $region95: #{tpu_custom_call.1} parent=1 // pred_check_branch
      %1648 = sbr.rel (0) target = $region97
    $region96: #{tpu_custom_call.1} parent=1 // pred_region
      %s1650 = ssub.s32 128, 128
      %1651 = vsyncadd [#allocation5], %s1650
      %s1652 = sshll.u32 [#allocation17], 4
      %s1653 = int_to_ptr.vmem [resolvable:$true] %s1652
      %1658 = dma.vmem_to_hbm [thread:$0]  %s1653, 128, %s15, [#allocation5], 64, 64, 4
    $region97: #{tpu_custom_call.1} parent=1 // pred_fallthru
      _
    // Predicated region
    $region98: #{tpu_custom_call.1} parent=1 // pred_check
      _
    $region99: #{tpu_custom_call.1} parent=1 // pred_check_branch
      %1660 = sbr.rel (0) target = $region101
    $region100: #{tpu_custom_call.1} parent=1 // pred_region
      %1661 = dma.done [#allocation5], 128
    $region101: #{tpu_custom_call.1} parent=1 // pred_fallthru
      _
    %1662 = vsyncpa [#allocation4], 1
    %1663 = vsyncpa [#allocation7], 1
    %1664 = vsyncpa [#allocation10], 1
    %1665 = vsyncpa [#allocation13], 1
    %1666 = vsyncpa [#allocation16], 1
    %1667 = vsyncpa [#allocation5], 1

</llo_original>
